<compile_context>
chip_gen: v5e
topology: v5e:2x2
jax: 0.10.0
libtpu: 0.0.40
codegen_flags: <defaults>
</compile_context>

<pallas_src>
import functools
import math

import jax
import jax.numpy as jnp
from jax.experimental import pallas as pl
from jax.experimental.pallas import tpu as pltpu


# ----------------------------- small helpers -------------------------------

def _round_up(n, m):
    return ((n + m - 1) // m) * m


def _tpu_defaults():
    """Generation-aware scoped-VMEM limit and max row tile.
    v5e/v6e (128 MiB physical VMEM): 64 MiB scoped limit, 1024-row tiles.
    v7x (64 MiB physical VMEM) or unknown: 32 MiB limit, 256-row tiles."""
    try:
        vmem = getattr(pltpu.get_tpu_info(), "vmem_capacity_bytes",
                       64 * 1024 * 1024)
    except Exception:
        vmem = 64 * 1024 * 1024
    if vmem >= 96 * 1024 * 1024:
        return 64 * 1024 * 1024, 1024
    return 32 * 1024 * 1024, 256


_VMEM_LIMIT, _MAX_TILE_M = _tpu_defaults()

_REP2 = lambda i: (0, 0)      # broadcast index map for un-tiled 2-D operands


def _cparams():
    return pltpu.CompilerParams(dimension_semantics=("parallel",),
                                vmem_limit_bytes=_VMEM_LIMIT)


def _pick_tile(m, max_tile=None, mult=16):
    """Row tile: multiple of `mult` (16 covers bf16 sublane packing), capped at
    max_tile, chosen so the grid has >= 2 steps when possible (v7x megacore).
    Ragged last blocks are handled by Pallas masking (no jnp.pad HBM pass)."""
    if max_tile is None:
        max_tile = _MAX_TILE_M
    if m <= mult:
        return m
    tile = min(_round_up(pl.cdiv(m, 2), mult), _round_up(max_tile, mult))
    return m if tile >= m else tile


# ----------------------------- conv backbone --------------------------------

def _conv_kernel(x_ref, w_ref, b_ref, o_ref):
    # x_ref: (G, 3*(W+2)*Cin) f32 flattened input windows
    # w_ref: (3*(W+2)*Cin, W*Cout) bf16 block-Toeplitz weight
    # b_ref: (1, W*Cout) f32      o_ref: (G, W*Cout) f32  (lane-dense store)
    acc = jnp.dot(x_ref[...].astype(jnp.bfloat16), w_ref[...],
                  preferred_element_type=jnp.float32)
    o_ref[...] = jnp.maximum(acc + b_ref[...], 0.0)


def _toeplitz_weight(w, W):
    """(3,3,Cin,Cout) conv weight -> block-Toeplitz (3*(W+2)*Cin, W*Cout) matrix
    so one whole 3-row x (W+2)-col window maps to a full output row with ONE MXU
    matmul and a lane-dense store.  (For very large W a W-tiled K=9*Cin variant
    would be preferable; fine for audio-frame widths.)"""
    _, _, Cin, Cout = w.shape
    p = jnp.arange(W + 2)[:, None, None]
    wo = jnp.arange(W)[None, :, None]
    kw = jnp.arange(3)[None, None, :]
    sel = (p == wo + kw).astype(w.dtype)                     # (W+2, W, 3)
    wt = jnp.einsum("pwk,hkio->hpiwo", sel, w)               # (3, W+2, Cin, W, Cout)
    return wt.reshape(3 * (W + 2) * Cin, W * Cout)


def conv3x3_stride3_relu(x, w, b, *, stride_h=3):
    """3x3 conv, stride (3, 1), padding (1, 1), fused ReLU.
    x: (B, H, W, Cin) channel-last -> (B, Hout, W, Cout)."""
    if stride_h != 3:
        # TODO(synk): grouped-row trick assumes stride == kernel == 3
        raise NotImplementedError("conv kernel assumes down_sample_factor == 3")
    B, H, W, Cin = x.shape
    Cout = w.shape[-1]
    Hout = (H + 2 - 3) // stride_h + 1

    # Single jnp.pad covering BOTH the H halo and the W halo (one HBM pass).
    pad_bottom = max(0, stride_h * Hout - (H + 1))
    xp = jnp.pad(x, ((0, 0), (1, pad_bottom), (1, 1), (0, 0)))
    xp = xp[:, :stride_h * Hout]                             # (B, 3*Hout, W+2, Cin)

    rows = B * Hout
    G = min(32, max(8, _round_up(pl.cdiv(rows, 2), 8)))      # >=2 steps when possible
    G = min(G, _round_up(rows, 8))
    rowsP = _round_up(rows, G)
    xg = xp.reshape(rows, 3 * (W + 2) * Cin)                 # contiguous reshape
    if rowsP != rows:
        xg = jnp.pad(xg, ((0, rowsP - rows), (0, 0)))

    wt = _toeplitz_weight(w, W)
    bt = jnp.tile(b, W).reshape(1, W * Cout)

    out = pl.pallas_call(
        _conv_kernel,
        grid=(rowsP // G,),
        in_specs=[
            pl.BlockSpec((G, 3 * (W + 2) * Cin), lambda i: (i, 0)),
            pl.BlockSpec(wt.shape, _REP2),
            pl.BlockSpec((1, W * Cout), _REP2),
        ],
        out_specs=pl.BlockSpec((G, W * Cout), lambda i: (i, 0)),
        out_shape=jax.ShapeDtypeStruct((rowsP, W * Cout), jnp.float32),
        compiler_params=_cparams(),
    )(xg, wt, bt)
    return out[:rows].reshape(B, Hout, W, Cout)


# ------------------------ fused transformer kernels -------------------------

def _attn_front_kernel(x_ref, g_ref, b_ref, wqkv_ref, bqkv_ref, o_ref, *,
                       num_heads, causal, scale):
    """LayerNorm (f32 stats) + fused QKV projection + multi-head attention for
    one batch element.  Heads stay packed along the lane dim of qkv, each head's
    output is stored directly (no concatenate relayout), and the softmax scale
    is folded into q ((T,dh) multiply instead of (T,T))."""
    x = x_ref[0]                                             # (T, D) f32
    T, D = x.shape
    dh = D // num_heads
    mu = jnp.mean(x, axis=-1, keepdims=True)
    var = jnp.mean(jnp.square(x - mu), axis=-1, keepdims=True)
    h = (x - mu) * jax.lax.rsqrt(var + 1e-5) * g_ref[...] + b_ref[...]
    qkv = jnp.dot(h.astype(jnp.bfloat16), wqkv_ref[...],
                  preferred_element_type=jnp.float32) + bqkv_ref[...]   # (T, 3D)
    if causal:
        r = jax.lax.broadcasted_iota(jnp.int32, (T, T), 0)
        c = jax.lax.broadcasted_iota(jnp.int32, (T, T), 1)
        mask = r >= c
    # TODO(synk): for long T switch to a flash-style KV-tiled loop with running
    # max/sum scratch instead of materialising (T, T) scores (v7x 64 MiB VMEM).
    for hd in range(num_heads):
        q = (qkv[:, hd * dh:(hd + 1) * dh] * scale).astype(jnp.bfloat16)
        k = qkv[:, D + hd * dh:D + (hd + 1) * dh].astype(jnp.bfloat16)
        v = qkv[:, 2 * D + hd * dh:2 * D + (hd + 1) * dh].astype(jnp.bfloat16)
        s = jax.lax.dot_general(q, k, (((1,), (1,)), ((), ())),
                                preferred_element_type=jnp.float32)
        if causal:
            s = jnp.where(mask, s, -1e30)
        s = s - jnp.max(s, axis=-1, keepdims=True)           # softmax in f32, exact
        p = jnp.exp(s)
        p = p / jnp.sum(p, axis=-1, keepdims=True)
        o = jnp.dot(p.astype(jnp.bfloat16), v, preferred_element_type=jnp.float32)
        o_ref[0, :, hd * dh:(hd + 1) * dh] = o.astype(o_ref.dtype)


def attention_front(x3d, g, b, wqkv, bqkv, num_heads, causal):
    """x3d: (B, T, D) f32 -> (B, T, D) bf16 attention output (pre out-proj)."""
    B, T, D = x3d.shape
    scale = 1.0 / math.sqrt(D // num_heads)
    flops = 2 * B * T * D * 3 * D + 4 * B * T * T * D
    bytes_acc = (x3d.size * 4 + wqkv.size * 2 + bqkv.size * 4 + 2 * D * 4
                 + B * T * D * 2)
    kernel = functools.partial(_attn_front_kernel, num_heads=num_heads,
                               causal=causal, scale=scale)
    return pl.pallas_call(
        kernel,
        grid=(B,),
        in_specs=[
            pl.BlockSpec((1, T, D), lambda i: (i, 0, 0)),
            pl.BlockSpec((1, D), _REP2),
            pl.BlockSpec((1, D), _REP2),
            pl.BlockSpec((D, 3 * D), _REP2),
            pl.BlockSpec((1, 3 * D), _REP2),
        ],
        out_specs=pl.BlockSpec((1, T, D), lambda i: (i, 0, 0)),
        # bf16 output: halves HBM traffic of the largest inter-kernel
        # intermediate; only ever consumed by a bf16 matmul.
        out_shape=jax.ShapeDtypeStruct((B, T, D), jnp.bfloat16),
        compiler_params=_cparams(),
        cost_estimate=pl.CostEstimate(flops=int(flops),
                                      transcendentals=int(B * num_heads * T * T),
                                      bytes_accessed=int(bytes_acc)),
    )(x3d, g.reshape(1, D), b.reshape(1, D), wqkv, bqkv.reshape(1, 3 * D))


def _block_tail_kernel(attn_ref, x_ref, wo_ref, bo_ref, g_ref, b_ref,
                       w1_ref, b1_ref, w2_ref, b2_ref, o_ref):
    """out-proj + residual + LN2 + FFN (w1, ReLU, w2) + residual, one kernel."""
    h = (jnp.dot(attn_ref[...], wo_ref[...], preferred_element_type=jnp.float32)
         + bo_ref[...] + x_ref[...])
    mu = jnp.mean(h, axis=-1, keepdims=True)
    var = jnp.mean(jnp.square(h - mu), axis=-1, keepdims=True)
    n = (h - mu) * jax.lax.rsqrt(var + 1e-5) * g_ref[...] + b_ref[...]
    f1 = jnp.maximum(
        jnp.dot(n.astype(jnp.bfloat16), w1_ref[...],
                preferred_element_type=jnp.float32) + b1_ref[...], 0.0)
    f2 = jnp.dot(f1.astype(jnp.bfloat16), w2_ref[...],
                 preferred_element_type=jnp.float32) + b2_ref[...]
    o_ref[...] = h + f2


def block_tail(attn2d, x2d, wo, bo, g, b, w1, b1, w2, b2):
    """attn2d: (M, D) bf16, x2d: (M, D) f32 residual -> (M, D) f32."""
    M, D = x2d.shape
    E = w1.shape[1]
    tile = _pick_tile(M)
    flops = 2 * M * (D * D + 2 * D * E)
    bytes_acc = (M * D * 2 + 2 * M * D * 4
                 + (wo.size + w1.size + w2.size) * 2)
    return pl.pallas_call(
        _block_tail_kernel,
        grid=(pl.cdiv(M, tile),),
        in_specs=[
            pl.BlockSpec((tile, D), lambda i: (i, 0)),     # attention output (bf16)
            pl.BlockSpec((tile, D), lambda i: (i, 0)),     # residual x (f32)
            pl.BlockSpec((D, D), _REP2), pl.BlockSpec((1, D), _REP2),
            pl.BlockSpec((1, D), _REP2), pl.BlockSpec((1, D), _REP2),
            pl.BlockSpec((D, E), _REP2), pl.BlockSpec((1, E), _REP2),
            pl.BlockSpec((E, D), _REP2), pl.BlockSpec((1, D), _REP2),
        ],
        out_specs=pl.BlockSpec((tile, D), lambda i: (i, 0)),
        out_shape=jax.ShapeDtypeStruct((M, D), jnp.float32),
        compiler_params=_cparams(),
        cost_estimate=pl.CostEstimate(flops=int(flops), transcendentals=int(M),
                                      bytes_accessed=int(bytes_acc)),
    )(attn2d, x2d, wo, bo.reshape(1, D), g.reshape(1, D), b.reshape(1, D),
      w1, b1.reshape(1, E), w2, b2.reshape(1, D))


def _classifier_kernel(x_ref, w1_ref, b1_ref, w2_ref, b2_ref, o_ref):
    """fc1 + ReLU + fc2 fused; output written transposed (n_classes, tile_m) so
    the final store is lane-dense instead of masked n_classes/128 stores."""
    h = jnp.maximum(
        jnp.dot(x_ref[...].astype(jnp.bfloat16), w1_ref[...],
                preferred_element_type=jnp.float32) + b1_ref[...], 0.0)
    y = jax.lax.dot_general(w2_ref[...], h.astype(jnp.bfloat16),
                            (((1,), (1,)), ((), ())),
                            preferred_element_type=jnp.float32)
    o_ref[...] = y + b2_ref[...]


def classifier(x, w1, b1, w2, b2):
    M, D = x.shape
    E = w1.shape[1]
    N = w2.shape[0]                              # (n_classes, E) layout
    if M >= 256:                                 # transposed-out lane tiles need 128x
        tile = min(_round_up(pl.cdiv(M, 2), 128), _round_up(_MAX_TILE_M, 128))
        tile = tile if tile < M else M
    else:
        tile = M
    flops = 2 * M * E * (D + N)
    bytes_acc = M * D * 4 + (w1.size + w2.size) * 2 + N * M * 4
    return pl.pallas_call(
        _classifier_kernel,
        grid=(pl.cdiv(M, tile),),
        in_specs=[
            pl.BlockSpec((tile, D), lambda i: (i, 0)),
            pl.BlockSpec((D, E), _REP2),
            pl.BlockSpec((1, E), _REP2),
            pl.BlockSpec((N, E), _REP2),
            pl.BlockSpec((N, 1), _REP2),
        ],
        out_specs=pl.BlockSpec((N, tile), lambda i: (0, i)),
        out_shape=jax.ShapeDtypeStruct((N, M), jnp.float32),
        compiler_params=_cparams(),
        cost_estimate=pl.CostEstimate(flops=int(flops), transcendentals=0,
                                      bytes_accessed=int(bytes_acc)),
    )(x, w1, b1.reshape(1, E), w2, b2.reshape(N, 1))


# ----------------------------- model pieces --------------------------------

def sinusoidal_pe(T, D):
    pos = jnp.arange(T, dtype=jnp.float32)[:, None]
    i = jnp.arange(0, D, 2, dtype=jnp.float32)
    div = jnp.exp(-math.log(10000.0) * i / D)
    pe = jnp.zeros((T, D), jnp.float32)
    pe = pe.at[:, 0::2].set(jnp.sin(pos * div))
    pe = pe.at[:, 1::2].set(jnp.cos(pos * div))
    return pe


def cnn_attention_forward(x, params, cfg):
    """x: (B, n_mels, T)  ->  (B, n_classes, T)"""
    B, n_mels, T = x.shape
    h = x[..., None]                                     # channel-last (B, n_mels, T, 1)

    if cfg["flux"]:
        diff = h[:, :, 1:, :] - h[:, :, :-1, :]
        diff = jnp.maximum(jnp.pad(diff, ((0, 0), (0, 0), (1, 0), (0, 0))), 0.0)
        h = jnp.concatenate((h, diff), axis=-1)

    for (w, b) in params["conv"]:
        h = conv3x3_stride3_relu(h, w, b, stride_h=cfg["down_sample_factor"])

    Bc, Hm, Tt, C = h.shape
    D = C * Hm
    # PyTorch: reshape(B, C*Hm, T).permute(0, 2, 1)  (channel-major flatten)
    h = h.transpose(0, 2, 3, 1).reshape(Bc, Tt, D)

    if not cfg["use_relative_pos"]:
        h = h + sinusoidal_pe(Tt, D)[None]

    num_heads = cfg["num_heads"]
    causal = cfg["causal"]
    for bp in params["blocks"]:
        attn = attention_front(h, bp["ln1_g"], bp["ln1_b"],
                               bp["wqkv"], bp["bqkv"], num_heads, causal)
        h2d = block_tail(attn.reshape(Bc * Tt, D), h.reshape(Bc * Tt, D),
                         bp["wo"], bp["bo"], bp["ln2_g"], bp["ln2_b"],
                         bp["w1"], bp["b1"], bp["w2"], bp["b2"])
        h = h2d.reshape(Bc, Tt, D)

    logits_t = classifier(h.reshape(Bc * Tt, D),
                          params["fc1_w"], params["fc1_b"],
                          params["fc2_w"], params["fc2_b"])      # (n_classes, B*T)
    n_classes = params["fc2_w"].shape[0]
    return logits_t.reshape(n_classes, Bc, Tt).transpose(1, 0, 2)


# ----------------------------- parameter init ------------------------------

def init_params(key, cfg):
    n_mels = cfg["n_mels"]
    L = cfg["num_conv_layers"]
    dsf = cfg["down_sample_factor"]
    nch = cfg["num_channels"]
    mult = cfg["channel_multiplication"]
    if L > 0:
        D = n_mels // dsf ** L * nch * mult ** (L - 1)
    else:
        D = n_mels * (1 + int(cfg["flux"]))
    E = D * cfg["expansion_factor"]

    def nrm(k, shape):
        # matmul weights are stored bf16 (MXU path); biases / LN params stay f32
        return (0.05 * jax.random.normal(k, shape, jnp.float32)).astype(jnp.bfloat16)

    keys = iter(jax.random.split(key, 256))
    conv = []
    cin = 1 + int(cfg["flux"])
    for l in range(L):
        cout = nch * (mult ** l)
        conv.append((nrm(next(keys), (3, 3, cin, cout)),
                     jnp.zeros((cout,), jnp.float32)))
        cin = cout

    blocks = []
    for _ in range(cfg["num_attention_blocks"]):
        blocks.append(dict(
            ln1_g=jnp.ones((D,), jnp.float32), ln1_b=jnp.zeros((D,), jnp.float32),
            wqkv=nrm(next(keys), (D, 3 * D)), bqkv=jnp.zeros((3 * D,), jnp.float32),
            wo=nrm(next(keys), (D, D)), bo=jnp.zeros((D,), jnp.float32),
            ln2_g=jnp.ones((D,), jnp.float32), ln2_b=jnp.zeros((D,), jnp.float32),
            w1=nrm(next(keys), (D, E)), b1=jnp.zeros((E,), jnp.float32),
            w2=nrm(next(keys), (E, D)), b2=jnp.zeros((D,), jnp.float32),
        ))

    return dict(
        conv=conv,
        blocks=blocks,
        fc1_w=nrm(next(keys), (D, E)), fc1_b=jnp.zeros((E,), jnp.float32),
        fc2_w=nrm(next(keys), (cfg["n_classes"], E)),       # (out, in) layout
        fc2_b=jnp.zeros((cfg["n_classes"],), jnp.float32),
    )


# --------------------------------- main -------------------------------------

if __name__ == "__main__":
    cfg = dict(
        n_mels=36, n_classes=5, flux=False, causal=False,
        num_channels=4, num_attention_blocks=2, num_heads=4,
        expansion_factor=4, use_relative_pos=False,
        down_sample_factor=3, num_conv_layers=2, channel_multiplication=2,
    )
    B, T = 2, 16

    key = jax.random.PRNGKey(0)
    kx, kp = jax.random.split(key)
    x = jax.random.normal(kx, (B, cfg["n_mels"], T), jnp.float32)
    params = init_params(kp, cfg)

    fwd = jax.jit(functools.partial(cnn_attention_forward, cfg=cfg))
    out = jax.block_until_ready(fwd(x, params))
    assert out.shape == (B, cfg["n_classes"], T), out.shape
    assert bool(jnp.all(jnp.isfinite(out))), "non-finite output"
    print("KERNEL_OK")
</pallas_src>

<mosaic_0001>
module attributes {stable_mosaic.version = 11 : i64} {
  func.func @_conv_kernel(%arg0: i32, %arg1: memref<16x54xf32, #tpu.memory_space<vmem>>, %arg2: memref<54x64xbf16, #tpu.memory_space<vmem>>, %arg3: memref<1x64xf32, #tpu.memory_space<vmem>>, %arg4: memref<16x64xf32, #tpu.memory_space<vmem>>) attributes {dimension_semantics = [#tpu.dimension_semantics<parallel>], iteration_bounds = array<i64: 2>, scalar_prefetch = 0 : i64, scratch_operands = 0 : i64, tpu.core_type = #tpu.core_type<tc>, window_params = [{transform_indices = @transform_0, window_bounds = array<i64: 16, 54>}, {pipeline_mode = #tpu.pipeline_mode<synchronous>, transform_indices = @transform_1, window_bounds = array<i64: 54, 64>}, {pipeline_mode = #tpu.pipeline_mode<synchronous>, transform_indices = @transform_2, window_bounds = array<i64: 1, 64>}, {transform_indices = @transform_3, window_bounds = array<i64: 16, 64>}]} {
    %c0 = arith.constant 0 : index
    %c0_0 = arith.constant 0 : index
    %0 = vector.load %arg1[%c0, %c0_0] : memref<16x54xf32, #tpu.memory_space<vmem>>, vector<16x54xf32>
    %1 = arith.truncf %0 : vector<16x54xf32> to vector<16x54xbf16>
    %c0_1 = arith.constant 0 : index
    %c0_2 = arith.constant 0 : index
    %2 = vector.load %arg2[%c0_1, %c0_2] : memref<54x64xbf16, #tpu.memory_space<vmem>>, vector<54x64xbf16>
    %cst = arith.constant dense<0.000000e+00> : vector<16x64xf32>
    %3 = tpu.matmul %1, %2, %cst {dimension_numbers = #tpu.dot_dimension_numbers<[1], [0], [0], [1], [0, 0, 1, 1], [], []>} : vector<16x54xbf16>, vector<54x64xbf16>, vector<16x64xf32> -> vector<16x64xf32>
    %c0_3 = arith.constant 0 : index
    %c0_4 = arith.constant 0 : index
    %4 = vector.load %arg3[%c0_3, %c0_4] : memref<1x64xf32, #tpu.memory_space<vmem>>, vector<1x64xf32>
    %5 = vector.broadcast %4 : vector<1x64xf32> to vector<16x64xf32>
    %6 = arith.addf %3, %5 : vector<16x64xf32>
    %cst_5 = arith.constant 0.000000e+00 : f32
    %7 = vector.broadcast %cst_5 : f32 to vector<16x64xf32>
    %8 = arith.maximumf %6, %7 : vector<16x64xf32>
    %c0_6 = arith.constant 0 : index
    %c0_7 = arith.constant 0 : index
    %9 = vector.load %arg4[%c0_6, %c0_7] : memref<16x64xf32, #tpu.memory_space<vmem>>, vector<16x64xf32>
    tpu.vector_store %arg4[%c0_6, %c0_7], %8 {strides = array<i32>} : memref<16x64xf32, #tpu.memory_space<vmem>>, vector<16x64xf32>,
    return
  }
  func.func @transform_0(%arg0: i32) -> (i32, i32) {
    %c0_i32 = arith.constant 0 : i32
    %c0_i32_0 = arith.constant 0 : i32
    return %arg0, %c0_i32 : i32, i32
  }
  func.func @transform_1(%arg0: i32) -> (i32, i32) {
    %c0_i32 = arith.constant 0 : i32
    %c0_i32_0 = arith.constant 0 : i32
    %c0_i32_1 = arith.constant 0 : i32
    return %c0_i32, %c0_i32_0 : i32, i32
  }
  func.func @transform_2(%arg0: i32) -> (i32, i32) {
    %c0_i32 = arith.constant 0 : i32
    %c0_i32_0 = arith.constant 0 : i32
    %c0_i32_1 = arith.constant 0 : i32
    return %c0_i32, %c0_i32_0 : i32, i32
  }
  func.func @transform_3(%arg0: i32) -> (i32, i32) {
    %c0_i32 = arith.constant 0 : i32
    %c0_i32_0 = arith.constant 0 : i32
    return %arg0, %c0_i32 : i32, i32
  }
}

module attributes {stable_mosaic.version = 11 : i64} {
  func.func @_conv_kernel(%arg0: i32, %arg1: memref<8x216xf32, #tpu.memory_space<vmem>>, %arg2: memref<216x128xbf16, #tpu.memory_space<vmem>>, %arg3: memref<1x128xf32, #tpu.memory_space<vmem>>, %arg4: memref<8x128xf32, #tpu.memory_space<vmem>>) attributes {dimension_semantics = [#tpu.dimension_semantics<parallel>], iteration_bounds = array<i64: 1>, scalar_prefetch = 0 : i64, scratch_operands = 0 : i64, tpu.core_type = #tpu.core_type<tc>, window_params = [{transform_indices = @transform_0, window_bounds = array<i64: 8, 216>}, {pipeline_mode = #tpu.pipeline_mode<synchronous>, transform_indices = @transform_1, window_bounds = array<i64: 216, 128>}, {pipeline_mode = #tpu.pipeline_mode<synchronous>, transform_indices = @transform_2, window_bounds = array<i64: 1, 128>}, {transform_indices = @transform_3, window_bounds = array<i64: 8, 128>}]} {
    %c0 = arith.constant 0 : index
    %c0_0 = arith.constant 0 : index
    %0 = vector.load %arg1[%c0, %c0_0] : memref<8x216xf32, #tpu.memory_space<vmem>>, vector<8x216xf32>
    %1 = arith.truncf %0 : vector<8x216xf32> to vector<8x216xbf16>
    %c0_1 = arith.constant 0 : index
    %c0_2 = arith.constant 0 : index
    %2 = vector.load %arg2[%c0_1, %c0_2] : memref<216x128xbf16, #tpu.memory_space<vmem>>, vector<216x128xbf16>
    %cst = arith.constant dense<0.000000e+00> : vector<8x128xf32>
    %3 = tpu.matmul %1, %2, %cst {dimension_numbers = #tpu.dot_dimension_numbers<[1], [0], [0], [1], [0, 0, 1, 1], [], []>} : vector<8x216xbf16>, vector<216x128xbf16>, vector<8x128xf32> -> vector<8x128xf32>
    %c0_3 = arith.constant 0 : index
    %c0_4 = arith.constant 0 : index
    %4 = vector.load %arg3[%c0_3, %c0_4] : memref<1x128xf32, #tpu.memory_space<vmem>>, vector<1x128xf32>
    %5 = vector.broadcast %4 : vector<1x128xf32> to vector<8x128xf32>
    %6 = arith.addf %3, %5 : vector<8x128xf32>
    %cst_5 = arith.constant 0.000000e+00 : f32
    %7 = vector.broadcast %cst_5 : f32 to vector<8x128xf32>
    %8 = arith.maximumf %6, %7 : vector<8x128xf32>
    %c0_6 = arith.constant 0 : index
    %c0_7 = arith.constant 0 : index
    %9 = vector.load %arg4[%c0_6, %c0_7] : memref<8x128xf32, #tpu.memory_space<vmem>>, vector<8x128xf32>
    tpu.vector_store %arg4[%c0_6, %c0_7], %8 {strides = array<i32>} : memref<8x128xf32, #tpu.memory_space<vmem>>, vector<8x128xf32>,
    return
  }
  func.func @transform_0(%arg0: i32) -> (i32, i32) {
    %c0_i32 = arith.constant 0 : i32
    %c0_i32_0 = arith.constant 0 : i32
    return %arg0, %c0_i32 : i32, i32
  }
  func.func @transform_1(%arg0: i32) -> (i32, i32) {
    %c0_i32 = arith.constant 0 : i32
    %c0_i32_0 = arith.constant 0 : i32
    %c0_i32_1 = arith.constant 0 : i32
    return %c0_i32, %c0_i32_0 : i32, i32
  }
  func.func @transform_2(%arg0: i32) -> (i32, i32) {
    %c0_i32 = arith.constant 0 : i32
    %c0_i32_0 = arith.constant 0 : i32
    %c0_i32_1 = arith.constant 0 : i32
    return %c0_i32, %c0_i32_0 : i32, i32
  }
  func.func @transform_3(%arg0: i32) -> (i32, i32) {
    %c0_i32 = arith.constant 0 : i32
    %c0_i32_0 = arith.constant 0 : i32
    return %arg0, %c0_i32 : i32, i32
  }
}

module attributes {stable_mosaic.version = 11 : i64} {
  func.func @_attn_front_kernel(%arg0: i32, %arg1: memref<1x16x32xf32, #tpu.memory_space<vmem>>, %arg2: memref<1x32xf32, #tpu.memory_space<vmem>>, %arg3: memref<1x32xf32, #tpu.memory_space<vmem>>, %arg4: memref<32x96xbf16, #tpu.memory_space<vmem>>, %arg5: memref<1x96xf32, #tpu.memory_space<vmem>>, %arg6: memref<1x16x32xbf16, #tpu.memory_space<vmem>>) attributes {dimension_semantics = [#tpu.dimension_semantics<parallel>], iteration_bounds = array<i64: 2>, scalar_prefetch = 0 : i64, scratch_operands = 0 : i64, tpu.core_type = #tpu.core_type<tc>, window_params = [{transform_indices = @transform_0, window_bounds = array<i64: 1, 16, 32>}, {pipeline_mode = #tpu.pipeline_mode<synchronous>, transform_indices = @transform_1, window_bounds = array<i64: 1, 32>}, {pipeline_mode = #tpu.pipeline_mode<synchronous>, transform_indices = @transform_2, window_bounds = array<i64: 1, 32>}, {pipeline_mode = #tpu.pipeline_mode<synchronous>, transform_indices = @transform_3, window_bounds = array<i64: 32, 96>}, {pipeline_mode = #tpu.pipeline_mode<synchronous>, transform_indices = @transform_4, window_bounds = array<i64: 1, 96>}, {transform_indices = @transform_5, window_bounds = array<i64: 1, 16, 32>}]} {
    %c0 = arith.constant 0 : index
    %c0_0 = arith.constant 0 : index
    %c0_1 = arith.constant 0 : index
    %0 = vector.load %arg1[%c0, %c0_0, %c0_1] : memref<1x16x32xf32, #tpu.memory_space<vmem>>, vector<1x16x32xf32>
    %1 = vector.shape_cast %0 : vector<1x16x32xf32> to vector<16x32xf32>
    %cst = arith.constant dense<0.000000e+00> : vector<16xf32>
    %2 = vector.multi_reduction <add>, %1, %cst [1] : vector<16x32xf32> to vector<16xf32>
    %3 = vector.shape_cast %2 : vector<16xf32> to vector<16x1xf32>
    %cst_2 = arith.constant 3.200000e+01 : f32
    %4 = vector.broadcast %cst_2 : f32 to vector<16x1xf32>
    %5 = arith.divf %3, %4 : vector<16x1xf32>
    %6 = vector.broadcast %5 : vector<16x1xf32> to vector<16x32xf32>
    %7 = arith.subf %1, %6 : vector<16x32xf32>
    %8 = arith.mulf %7, %7 : vector<16x32xf32>
    %cst_3 = arith.constant dense<0.000000e+00> : vector<16xf32>
    %9 = vector.multi_reduction <add>, %8, %cst_3 [1] : vector<16x32xf32> to vector<16xf32>
    %10 = vector.shape_cast %9 : vector<16xf32> to vector<16x1xf32>
    %cst_4 = arith.constant 3.200000e+01 : f32
    %11 = vector.broadcast %cst_4 : f32 to vector<16x1xf32>
    %12 = arith.divf %10, %11 : vector<16x1xf32>
    %13 = vector.broadcast %5 : vector<16x1xf32> to vector<16x32xf32>
    %14 = arith.subf %1, %13 : vector<16x32xf32>
    %cst_5 = arith.constant 9.99999974E-6 : f32
    %15 = vector.broadcast %cst_5 : f32 to vector<16x1xf32>
    %16 = arith.addf %12, %15 : vector<16x1xf32>
    %17 = math.rsqrt %16 : vector<16x1xf32>
    %18 = vector.broadcast %17 : vector<16x1xf32> to vector<16x32xf32>
    %19 = arith.mulf %14, %18 : vector<16x32xf32>
    %c0_6 = arith.constant 0 : index
    %c0_7 = arith.constant 0 : index
    %20 = vector.load %arg2[%c0_6, %c0_7] : memref<1x32xf32, #tpu.memory_space<vmem>>, vector<1x32xf32>
    %21 = vector.broadcast %20 : vector<1x32xf32> to vector<16x32xf32>
    %22 = arith.mulf %19, %21 : vector<16x32xf32>
    %c0_8 = arith.constant 0 : index
    %c0_9 = arith.constant 0 : index
    %23 = vector.load %arg3[%c0_8, %c0_9] : memref<1x32xf32, #tpu.memory_space<vmem>>, vector<1x32xf32>
    %24 = vector.broadcast %23 : vector<1x32xf32> to vector<16x32xf32>
    %25 = arith.addf %22, %24 : vector<16x32xf32>
    %26 = arith.truncf %25 : vector<16x32xf32> to vector<16x32xbf16>
    %c0_10 = arith.constant 0 : index
    %c0_11 = arith.constant 0 : index
    %27 = vector.load %arg4[%c0_10, %c0_11] : memref<32x96xbf16, #tpu.memory_space<vmem>>, vector<32x96xbf16>
    %cst_12 = arith.constant dense<0.000000e+00> : vector<16x96xf32>
    %28 = tpu.matmul %26, %27, %cst_12 {dimension_numbers = #tpu.dot_dimension_numbers<[1], [0], [0], [1], [0, 0, 1, 1], [], []>} : vector<16x32xbf16>, vector<32x96xbf16>, vector<16x96xf32> -> vector<16x96xf32>
    %c0_13 = arith.constant 0 : index
    %c0_14 = arith.constant 0 : index
    %29 = vector.load %arg5[%c0_13, %c0_14] : memref<1x96xf32, #tpu.memory_space<vmem>>, vector<1x96xf32>
    %30 = vector.broadcast %29 : vector<1x96xf32> to vector<16x96xf32>
    %31 = arith.addf %28, %30 : vector<16x96xf32>
    %32 = vector.extract_strided_slice %31 {offsets = [0, 0], sizes = [16, 8], strides = [1, 1]} : vector<16x96xf32> to vector<16x8xf32>
    %cst_15 = arith.constant 0.353553385 : f32
    %33 = vector.broadcast %cst_15 : f32 to vector<16x8xf32>
    %34 = arith.mulf %32, %33 : vector<16x8xf32>
    %35 = arith.truncf %34 : vector<16x8xf32> to vector<16x8xbf16>
    %36 = vector.extract_strided_slice %31 {offsets = [0, 32], sizes = [16, 8], strides = [1, 1]} : vector<16x96xf32> to vector<16x8xf32>
    %37 = arith.truncf %36 : vector<16x8xf32> to vector<16x8xbf16>
    %38 = vector.extract_strided_slice %31 {offsets = [0, 64], sizes = [16, 8], strides = [1, 1]} : vector<16x96xf32> to vector<16x8xf32>
    %39 = arith.truncf %38 : vector<16x8xf32> to vector<16x8xbf16>
    %cst_16 = arith.constant dense<0.000000e+00> : vector<16x16xf32>
    %40 = tpu.matmul %35, %37, %cst_16 {dimension_numbers = #tpu.dot_dimension_numbers<[1], [1], [0], [0], [0, 0, 1, 0], [], []>} : vector<16x8xbf16>, vector<16x8xbf16>, vector<16x16xf32> -> vector<16x16xf32>
    %cst_17 = arith.constant dense<0xFF800000> : vector<16xf32>
    %41 = vector.multi_reduction <maximumf>, %40, %cst_17 [1] : vector<16x16xf32> to vector<16xf32>
    %42 = vector.shape_cast %41 : vector<16xf32> to vector<16x1xf32>
    %43 = vector.broadcast %42 : vector<16x1xf32> to vector<16x16xf32>
    %44 = arith.subf %40, %43 : vector<16x16xf32>
    %45 = math.exp %44 : vector<16x16xf32>
    %cst_18 = arith.constant dense<0.000000e+00> : vector<16xf32>
    %46 = vector.multi_reduction <add>, %45, %cst_18 [1] : vector<16x16xf32> to vector<16xf32>
    %47 = vector.shape_cast %46 : vector<16xf32> to vector<16x1xf32>
    %48 = vector.broadcast %47 : vector<16x1xf32> to vector<16x16xf32>
    %49 = arith.divf %45, %48 : vector<16x16xf32>
    %50 = arith.truncf %49 : vector<16x16xf32> to vector<16x16xbf16>
    %cst_19 = arith.constant dense<0.000000e+00> : vector<16x8xf32>
    %51 = tpu.matmul %50, %39, %cst_19 {dimension_numbers = #tpu.dot_dimension_numbers<[1], [0], [0], [1], [0, 0, 1, 1], [], []>} : vector<16x16xbf16>, vector<16x8xbf16>, vector<16x8xf32> -> vector<16x8xf32>
    %52 = arith.truncf %51 : vector<16x8xf32> to vector<16x8xbf16>
    %c0_20 = arith.constant 0 : index
    %c0_21 = arith.constant 0 : index
    %c0_22 = arith.constant 0 : index
    %53 = vector.load %arg6[%c0_20, %c0_21, %c0_22] : memref<1x16x32xbf16, #tpu.memory_space<vmem>>, vector<1x16x8xbf16>
    %54 = vector.shape_cast %53 : vector<1x16x8xbf16> to vector<16x8xbf16>
    %55 = vector.shape_cast %52 : vector<16x8xbf16> to vector<1x16x8xbf16>
    tpu.vector_store %arg6[%c0_20, %c0_21, %c0_22], %55 {strides = array<i32>} : memref<1x16x32xbf16, #tpu.memory_space<vmem>>, vector<1x16x8xbf16>,
    %56 = vector.extract_strided_slice %31 {offsets = [0, 8], sizes = [16, 8], strides = [1, 1]} : vector<16x96xf32> to vector<16x8xf32>
    %cst_23 = arith.constant 0.353553385 : f32
    %57 = vector.broadcast %cst_23 : f32 to vector<16x8xf32>
    %58 = arith.mulf %56, %57 : vector<16x8xf32>
    %59 = arith.truncf %58 : vector<16x8xf32> to vector<16x8xbf16>
    %60 = vector.extract_strided_slice %31 {offsets = [0, 40], sizes = [16, 8], strides = [1, 1]} : vector<16x96xf32> to vector<16x8xf32>
    %61 = arith.truncf %60 : vector<16x8xf32> to vector<16x8xbf16>
    %62 = vector.extract_strided_slice %31 {offsets = [0, 72], sizes = [16, 8], strides = [1, 1]} : vector<16x96xf32> to vector<16x8xf32>
    %63 = arith.truncf %62 : vector<16x8xf32> to vector<16x8xbf16>
    %cst_24 = arith.constant dense<0.000000e+00> : vector<16x16xf32>
    %64 = tpu.matmul %59, %61, %cst_24 {dimension_numbers = #tpu.dot_dimension_numbers<[1], [1], [0], [0], [0, 0, 1, 0], [], []>} : vector<16x8xbf16>, vector<16x8xbf16>, vector<16x16xf32> -> vector<16x16xf32>
    %cst_25 = arith.constant dense<0xFF800000> : vector<16xf32>
    %65 = vector.multi_reduction <maximumf>, %64, %cst_25 [1] : vector<16x16xf32> to vector<16xf32>
    %66 = vector.shape_cast %65 : vector<16xf32> to vector<16x1xf32>
    %67 = vector.broadcast %66 : vector<16x1xf32> to vector<16x16xf32>
    %68 = arith.subf %64, %67 : vector<16x16xf32>
    %69 = math.exp %68 : vector<16x16xf32>
    %cst_26 = arith.constant dense<0.000000e+00> : vector<16xf32>
    %70 = vector.multi_reduction <add>, %69, %cst_26 [1] : vector<16x16xf32> to vector<16xf32>
    %71 = vector.shape_cast %70 : vector<16xf32> to vector<16x1xf32>
    %72 = vector.broadcast %71 : vector<16x1xf32> to vector<16x16xf32>
    %73 = arith.divf %69, %72 : vector<16x16xf32>
    %74 = arith.truncf %73 : vector<16x16xf32> to vector<16x16xbf16>
    %cst_27 = arith.constant dense<0.000000e+00> : vector<16x8xf32>
    %75 = tpu.matmul %74, %63, %cst_27 {dimension_numbers = #tpu.dot_dimension_numbers<[1], [0], [0], [1], [0, 0, 1, 1], [], []>} : vector<16x16xbf16>, vector<16x8xbf16>, vector<16x8xf32> -> vector<16x8xf32>
    %76 = arith.truncf %75 : vector<16x8xf32> to vector<16x8xbf16>
    %c0_28 = arith.constant 0 : index
    %c0_29 = arith.constant 0 : index
    %c8 = arith.constant 8 : index
    %77 = vector.load %arg6[%c0_28, %c0_29, %c8] : memref<1x16x32xbf16, #tpu.memory_space<vmem>>, vector<1x16x8xbf16>
    %78 = vector.shape_cast %77 : vector<1x16x8xbf16> to vector<16x8xbf16>
    %79 = vector.shape_cast %76 : vector<16x8xbf16> to vector<1x16x8xbf16>
    tpu.vector_store %arg6[%c0_28, %c0_29, %c8], %79 {strides = array<i32>} : memref<1x16x32xbf16, #tpu.memory_space<vmem>>, vector<1x16x8xbf16>,
    %80 = vector.extract_strided_slice %31 {offsets = [0, 16], sizes = [16, 8], strides = [1, 1]} : vector<16x96xf32> to vector<16x8xf32>
    %cst_30 = arith.constant 0.353553385 : f32
    %81 = vector.broadcast %cst_30 : f32 to vector<16x8xf32>
    %82 = arith.mulf %80, %81 : vector<16x8xf32>
    %83 = arith.truncf %82 : vector<16x8xf32> to vector<16x8xbf16>
    %84 = vector.extract_strided_slice %31 {offsets = [0, 48], sizes = [16, 8], strides = [1, 1]} : vector<16x96xf32> to vector<16x8xf32>
    %85 = arith.truncf %84 : vector<16x8xf32> to vector<16x8xbf16>
    %86 = vector.extract_strided_slice %31 {offsets = [0, 80], sizes = [16, 8], strides = [1, 1]} : vector<16x96xf32> to vector<16x8xf32>
    %87 = arith.truncf %86 : vector<16x8xf32> to vector<16x8xbf16>
    %cst_31 = arith.constant dense<0.000000e+00> : vector<16x16xf32>
    %88 = tpu.matmul %83, %85, %cst_31 {dimension_numbers = #tpu.dot_dimension_numbers<[1], [1], [0], [0], [0, 0, 1, 0], [], []>} : vector<16x8xbf16>, vector<16x8xbf16>, vector<16x16xf32> -> vector<16x16xf32>
    %cst_32 = arith.constant dense<0xFF800000> : vector<16xf32>
    %89 = vector.multi_reduction <maximumf>, %88, %cst_32 [1] : vector<16x16xf32> to vector<16xf32>
    %90 = vector.shape_cast %89 : vector<16xf32> to vector<16x1xf32>
    %91 = vector.broadcast %90 : vector<16x1xf32> to vector<16x16xf32>
    %92 = arith.subf %88, %91 : vector<16x16xf32>
    %93 = math.exp %92 : vector<16x16xf32>
    %cst_33 = arith.constant dense<0.000000e+00> : vector<16xf32>
    %94 = vector.multi_reduction <add>, %93, %cst_33 [1] : vector<16x16xf32> to vector<16xf32>
    %95 = vector.shape_cast %94 : vector<16xf32> to vector<16x1xf32>
    %96 = vector.broadcast %95 : vector<16x1xf32> to vector<16x16xf32>
    %97 = arith.divf %93, %96 : vector<16x16xf32>
    %98 = arith.truncf %97 : vector<16x16xf32> to vector<16x16xbf16>
    %cst_34 = arith.constant dense<0.000000e+00> : vector<16x8xf32>
    %99 = tpu.matmul %98, %87, %cst_34 {dimension_numbers = #tpu.dot_dimension_numbers<[1], [0], [0], [1], [0, 0, 1, 1], [], []>} : vector<16x16xbf16>, vector<16x8xbf16>, vector<16x8xf32> -> vector<16x8xf32>
    %100 = arith.truncf %99 : vector<16x8xf32> to vector<16x8xbf16>
    %c0_35 = arith.constant 0 : index
    %c0_36 = arith.constant 0 : index
    %c16 = arith.constant 16 : index
    %101 = vector.load %arg6[%c0_35, %c0_36, %c16] : memref<1x16x32xbf16, #tpu.memory_space<vmem>>, vector<1x16x8xbf16>
    %102 = vector.shape_cast %101 : vector<1x16x8xbf16> to vector<16x8xbf16>
    %103 = vector.shape_cast %100 : vector<16x8xbf16> to vector<1x16x8xbf16>
    tpu.vector_store %arg6[%c0_35, %c0_36, %c16], %103 {strides = array<i32>} : memref<1x16x32xbf16, #tpu.memory_space<vmem>>, vector<1x16x8xbf16>,
    %104 = vector.extract_strided_slice %31 {offsets = [0, 24], sizes = [16, 8], strides = [1, 1]} : vector<16x96xf32> to vector<16x8xf32>
    %cst_37 = arith.constant 0.353553385 : f32
    %105 = vector.broadcast %cst_37 : f32 to vector<16x8xf32>
    %106 = arith.mulf %104, %105 : vector<16x8xf32>
    %107 = arith.truncf %106 : vector<16x8xf32> to vector<16x8xbf16>
    %108 = vector.extract_strided_slice %31 {offsets = [0, 56], sizes = [16, 8], strides = [1, 1]} : vector<16x96xf32> to vector<16x8xf32>
    %109 = arith.truncf %108 : vector<16x8xf32> to vector<16x8xbf16>
    %110 = vector.extract_strided_slice %31 {offsets = [0, 88], sizes = [16, 8], strides = [1, 1]} : vector<16x96xf32> to vector<16x8xf32>
    %111 = arith.truncf %110 : vector<16x8xf32> to vector<16x8xbf16>
    %cst_38 = arith.constant dense<0.000000e+00> : vector<16x16xf32>
    %112 = tpu.matmul %107, %109, %cst_38 {dimension_numbers = #tpu.dot_dimension_numbers<[1], [1], [0], [0], [0, 0, 1, 0], [], []>} : vector<16x8xbf16>, vector<16x8xbf16>, vector<16x16xf32> -> vector<16x16xf32>
    %cst_39 = arith.constant dense<0xFF800000> : vector<16xf32>
    %113 = vector.multi_reduction <maximumf>, %112, %cst_39 [1] : vector<16x16xf32> to vector<16xf32>
    %114 = vector.shape_cast %113 : vector<16xf32> to vector<16x1xf32>
    %115 = vector.broadcast %114 : vector<16x1xf32> to vector<16x16xf32>
    %116 = arith.subf %112, %115 : vector<16x16xf32>
    %117 = math.exp %116 : vector<16x16xf32>
    %cst_40 = arith.constant dense<0.000000e+00> : vector<16xf32>
    %118 = vector.multi_reduction <add>, %117, %cst_40 [1] : vector<16x16xf32> to vector<16xf32>
    %119 = vector.shape_cast %118 : vector<16xf32> to vector<16x1xf32>
    %120 = vector.broadcast %119 : vector<16x1xf32> to vector<16x16xf32>
    %121 = arith.divf %117, %120 : vector<16x16xf32>
    %122 = arith.truncf %121 : vector<16x16xf32> to vector<16x16xbf16>
    %cst_41 = arith.constant dense<0.000000e+00> : vector<16x8xf32>
    %123 = tpu.matmul %122, %111, %cst_41 {dimension_numbers = #tpu.dot_dimension_numbers<[1], [0], [0], [1], [0, 0, 1, 1], [], []>} : vector<16x16xbf16>, vector<16x8xbf16>, vector<16x8xf32> -> vector<16x8xf32>
    %124 = arith.truncf %123 : vector<16x8xf32> to vector<16x8xbf16>
    %c0_42 = arith.constant 0 : index
    %c0_43 = arith.constant 0 : index
    %c24 = arith.constant 24 : index
    %125 = vector.load %arg6[%c0_42, %c0_43, %c24] : memref<1x16x32xbf16, #tpu.memory_space<vmem>>, vector<1x16x8xbf16>
    %126 = vector.shape_cast %125 : vector<1x16x8xbf16> to vector<16x8xbf16>
    %127 = vector.shape_cast %124 : vector<16x8xbf16> to vector<1x16x8xbf16>
    tpu.vector_store %arg6[%c0_42, %c0_43, %c24], %127 {strides = array<i32>} : memref<1x16x32xbf16, #tpu.memory_space<vmem>>, vector<1x16x8xbf16>,
    return
  }
  func.func @transform_0(%arg0: i32) -> (i32, i32, i32) {
    %c0_i32 = arith.constant 0 : i32
    %c0_i32_0 = arith.constant 0 : i32
    %c0_i32_1 = arith.constant 0 : i32
    return %arg0, %c0_i32, %c0_i32_0 : i32, i32, i32
  }
  func.func @transform_1(%arg0: i32) -> (i32, i32) {
    %c0_i32 = arith.constant 0 : i32
    %c0_i32_0 = arith.constant 0 : i32
    %c0_i32_1 = arith.constant 0 : i32
    return %c0_i32, %c0_i32_0 : i32, i32
  }
  func.func @transform_2(%arg0: i32) -> (i32, i32) {
    %c0_i32 = arith.constant 0 : i32
    %c0_i32_0 = arith.constant 0 : i32
    %c0_i32_1 = arith.constant 0 : i32
    return %c0_i32, %c0_i32_0 : i32, i32
  }
  func.func @transform_3(%arg0: i32) -> (i32, i32) {
    %c0_i32 = arith.constant 0 : i32
    %c0_i32_0 = arith.constant 0 : i32
    %c0_i32_1 = arith.constant 0 : i32
    return %c0_i32, %c0_i32_0 : i32, i32
  }
  func.func @transform_4(%arg0: i32) -> (i32, i32) {
    %c0_i32 = arith.constant 0 : i32
    %c0_i32_0 = arith.constant 0 : i32
    %c0_i32_1 = arith.constant 0 : i32
    return %c0_i32, %c0_i32_0 : i32, i32
  }
  func.func @transform_5(%arg0: i32) -> (i32, i32, i32) {
    %c0_i32 = arith.constant 0 : i32
    %c0_i32_0 = arith.constant 0 : i32
    %c0_i32_1 = arith.constant 0 : i32
    return %arg0, %c0_i32, %c0_i32_0 : i32, i32, i32
  }
}

module attributes {stable_mosaic.version = 11 : i64} {
  func.func @_block_tail_kernel(%arg0: i32, %arg1: memref<16x32xbf16, #tpu.memory_space<vmem>>, %arg2: memref<16x32xf32, #tpu.memory_space<vmem>>, %arg3: memref<32x32xbf16, #tpu.memory_space<vmem>>, %arg4: memref<1x32xf32, #tpu.memory_space<vmem>>, %arg5: memref<1x32xf32, #tpu.memory_space<vmem>>, %arg6: memref<1x32xf32, #tpu.memory_space<vmem>>, %arg7: memref<32x128xbf16, #tpu.memory_space<vmem>>, %arg8: memref<1x128xf32, #tpu.memory_space<vmem>>, %arg9: memref<128x32xbf16, #tpu.memory_space<vmem>>, %arg10: memref<1x32xf32, #tpu.memory_space<vmem>>, %arg11: memref<16x32xf32, #tpu.memory_space<vmem>>) attributes {dimension_semantics = [#tpu.dimension_semantics<parallel>], iteration_bounds = array<i64: 2>, scalar_prefetch = 0 : i64, scratch_operands = 0 : i64, tpu.core_type = #tpu.core_type<tc>, window_params = [{transform_indices = @transform_0, window_bounds = array<i64: 16, 32>}, {transform_indices = @transform_1, window_bounds = array<i64: 16, 32>}, {pipeline_mode = #tpu.pipeline_mode<synchronous>, transform_indices = @transform_2, window_bounds = array<i64: 32, 32>}, {pipeline_mode = #tpu.pipeline_mode<synchronous>, transform_indices = @transform_3, window_bounds = array<i64: 1, 32>}, {pipeline_mode = #tpu.pipeline_mode<synchronous>, transform_indices = @transform_4, window_bounds = array<i64: 1, 32>}, {pipeline_mode = #tpu.pipeline_mode<synchronous>, transform_indices = @transform_5, window_bounds = array<i64: 1, 32>}, {pipeline_mode = #tpu.pipeline_mode<synchronous>, transform_indices = @transform_6, window_bounds = array<i64: 32, 128>}, {pipeline_mode = #tpu.pipeline_mode<synchronous>, transform_indices = @transform_7, window_bounds = array<i64: 1, 128>}, {pipeline_mode = #tpu.pipeline_mode<synchronous>, transform_indices = @transform_8, window_bounds = array<i64: 128, 32>}, {pipeline_mode = #tpu.pipeline_mode<synchronous>, transform_indices = @transform_9, window_bounds = array<i64: 1, 32>}, {transform_indices = @transform_10, window_bounds = array<i64: 16, 32>}]} {
    %c0 = arith.constant 0 : index
    %c0_0 = arith.constant 0 : index
    %0 = vector.load %arg1[%c0, %c0_0] : memref<16x32xbf16, #tpu.memory_space<vmem>>, vector<16x32xbf16>
    %c0_1 = arith.constant 0 : index
    %c0_2 = arith.constant 0 : index
    %1 = vector.load %arg3[%c0_1, %c0_2] : memref<32x32xbf16, #tpu.memory_space<vmem>>, vector<32x32xbf16>
    %cst = arith.constant dense<0.000000e+00> : vector<16x32xf32>
    %2 = tpu.matmul %0, %1, %cst {dimension_numbers = #tpu.dot_dimension_numbers<[1], [0], [0], [1], [0, 0, 1, 1], [], []>} : vector<16x32xbf16>, vector<32x32xbf16>, vector<16x32xf32> -> vector<16x32xf32>
    %c0_3 = arith.constant 0 : index
    %c0_4 = arith.constant 0 : index
    %3 = vector.load %arg4[%c0_3, %c0_4] : memref<1x32xf32, #tpu.memory_space<vmem>>, vector<1x32xf32>
    %4 = vector.broadcast %3 : vector<1x32xf32> to vector<16x32xf32>
    %5 = arith.addf %2, %4 : vector<16x32xf32>
    %c0_5 = arith.constant 0 : index
    %c0_6 = arith.constant 0 : index
    %6 = vector.load %arg2[%c0_5, %c0_6] : memref<16x32xf32, #tpu.memory_space<vmem>>, vector<16x32xf32>
    %7 = arith.addf %5, %6 : vector<16x32xf32>
    %cst_7 = arith.constant dense<0.000000e+00> : vector<16xf32>
    %8 = vector.multi_reduction <add>, %7, %cst_7 [1] : vector<16x32xf32> to vector<16xf32>
    %9 = vector.shape_cast %8 : vector<16xf32> to vector<16x1xf32>
    %cst_8 = arith.constant 3.200000e+01 : f32
    %10 = vector.broadcast %cst_8 : f32 to vector<16x1xf32>
    %11 = arith.divf %9, %10 : vector<16x1xf32>
    %12 = vector.broadcast %11 : vector<16x1xf32> to vector<16x32xf32>
    %13 = arith.subf %7, %12 : vector<16x32xf32>
    %14 = arith.mulf %13, %13 : vector<16x32xf32>
    %cst_9 = arith.constant dense<0.000000e+00> : vector<16xf32>
    %15 = vector.multi_reduction <add>, %14, %cst_9 [1] : vector<16x32xf32> to vector<16xf32>
    %16 = vector.shape_cast %15 : vector<16xf32> to vector<16x1xf32>
    %cst_10 = arith.constant 3.200000e+01 : f32
    %17 = vector.broadcast %cst_10 : f32 to vector<16x1xf32>
    %18 = arith.divf %16, %17 : vector<16x1xf32>
    %19 = vector.broadcast %11 : vector<16x1xf32> to vector<16x32xf32>
    %20 = arith.subf %7, %19 : vector<16x32xf32>
    %cst_11 = arith.constant 9.99999974E-6 : f32
    %21 = vector.broadcast %cst_11 : f32 to vector<16x1xf32>
    %22 = arith.addf %18, %21 : vector<16x1xf32>
    %23 = math.rsqrt %22 : vector<16x1xf32>
    %24 = vector.broadcast %23 : vector<16x1xf32> to vector<16x32xf32>
    %25 = arith.mulf %20, %24 : vector<16x32xf32>
    %c0_12 = arith.constant 0 : index
    %c0_13 = arith.constant 0 : index
    %26 = vector.load %arg5[%c0_12, %c0_13] : memref<1x32xf32, #tpu.memory_space<vmem>>, vector<1x32xf32>
    %27 = vector.broadcast %26 : vector<1x32xf32> to vector<16x32xf32>
    %28 = arith.mulf %25, %27 : vector<16x32xf32>
    %c0_14 = arith.constant 0 : index
    %c0_15 = arith.constant 0 : index
    %29 = vector.load %arg6[%c0_14, %c0_15] : memref<1x32xf32, #tpu.memory_space<vmem>>, vector<1x32xf32>
    %30 = vector.broadcast %29 : vector<1x32xf32> to vector<16x32xf32>
    %31 = arith.addf %28, %30 : vector<16x32xf32>
    %32 = arith.truncf %31 : vector<16x32xf32> to vector<16x32xbf16>
    %c0_16 = arith.constant 0 : index
    %c0_17 = arith.constant 0 : index
    %33 = vector.load %arg7[%c0_16, %c0_17] : memref<32x128xbf16, #tpu.memory_space<vmem>>, vector<32x128xbf16>
    %cst_18 = arith.constant dense<0.000000e+00> : vector<16x128xf32>
    %34 = tpu.matmul %32, %33, %cst_18 {dimension_numbers = #tpu.dot_dimension_numbers<[1], [0], [0], [1], [0, 0, 1, 1], [], []>} : vector<16x32xbf16>, vector<32x128xbf16>, vector<16x128xf32> -> vector<16x128xf32>
    %c0_19 = arith.constant 0 : index
    %c0_20 = arith.constant 0 : index
    %35 = vector.load %arg8[%c0_19, %c0_20] : memref<1x128xf32, #tpu.memory_space<vmem>>, vector<1x128xf32>
    %36 = vector.broadcast %35 : vector<1x128xf32> to vector<16x128xf32>
    %37 = arith.addf %34, %36 : vector<16x128xf32>
    %cst_21 = arith.constant 0.000000e+00 : f32
    %38 = vector.broadcast %cst_21 : f32 to vector<16x128xf32>
    %39 = arith.maximumf %37, %38 : vector<16x128xf32>
    %40 = arith.truncf %39 : vector<16x128xf32> to vector<16x128xbf16>
    %c0_22 = arith.constant 0 : index
    %c0_23 = arith.constant 0 : index
    %41 = vector.load %arg9[%c0_22, %c0_23] : memref<128x32xbf16, #tpu.memory_space<vmem>>, vector<128x32xbf16>
    %cst_24 = arith.constant dense<0.000000e+00> : vector<16x32xf32>
    %42 = tpu.matmul %40, %41, %cst_24 {dimension_numbers = #tpu.dot_dimension_numbers<[1], [0], [0], [1], [0, 0, 1, 1], [], []>} : vector<16x128xbf16>, vector<128x32xbf16>, vector<16x32xf32> -> vector<16x32xf32>
    %c0_25 = arith.constant 0 : index
    %c0_26 = arith.constant 0 : index
    %43 = vector.load %arg10[%c0_25, %c0_26] : memref<1x32xf32, #tpu.memory_space<vmem>>, vector<1x32xf32>
    %44 = vector.broadcast %43 : vector<1x32xf32> to vector<16x32xf32>
    %45 = arith.addf %42, %44 : vector<16x32xf32>
    %46 = arith.addf %7, %45 : vector<16x32xf32>
    %c0_27 = arith.constant 0 : index
    %c0_28 = arith.constant 0 : index
    %47 = vector.load %arg11[%c0_27, %c0_28] : memref<16x32xf32, #tpu.memory_space<vmem>>, vector<16x32xf32>
    tpu.vector_store %arg11[%c0_27, %c0_28], %46 {strides = array<i32>} : memref<16x32xf32, #tpu.memory_space<vmem>>, vector<16x32xf32>,
    return
  }
  func.func @transform_0(%arg0: i32) -> (i32, i32) {
    %c0_i32 = arith.constant 0 : i32
    %c0_i32_0 = arith.constant 0 : i32
    return %arg0, %c0_i32 : i32, i32
  }
  func.func @transform_1(%arg0: i32) -> (i32, i32) {
    %c0_i32 = arith.constant 0 : i32
    %c0_i32_0 = arith.constant 0 : i32
    return %arg0, %c0_i32 : i32, i32
  }
  func.func @transform_2(%arg0: i32) -> (i32, i32) {
    %c0_i32 = arith.constant 0 : i32
    %c0_i32_0 = arith.constant 0 : i32
    %c0_i32_1 = arith.constant 0 : i32
    return %c0_i32, %c0_i32_0 : i32, i32
  }
  func.func @transform_3(%arg0: i32) -> (i32, i32) {
    %c0_i32 = arith.constant 0 : i32
    %c0_i32_0 = arith.constant 0 : i32
    %c0_i32_1 = arith.constant 0 : i32
    return %c0_i32, %c0_i32_0 : i32, i32
  }
  func.func @transform_4(%arg0: i32) -> (i32, i32) {
    %c0_i32 = arith.constant 0 : i32
    %c0_i32_0 = arith.constant 0 : i32
    %c0_i32_1 = arith.constant 0 : i32
    return %c0_i32, %c0_i32_0 : i32, i32
  }
  func.func @transform_5(%arg0: i32) -> (i32, i32) {
    %c0_i32 = arith.constant 0 : i32
    %c0_i32_0 = arith.constant 0 : i32
    %c0_i32_1 = arith.constant 0 : i32
    return %c0_i32, %c0_i32_0 : i32, i32
  }
  func.func @transform_6(%arg0: i32) -> (i32, i32) {
    %c0_i32 = arith.constant 0 : i32
    %c0_i32_0 = arith.constant 0 : i32
    %c0_i32_1 = arith.constant 0 : i32
    return %c0_i32, %c0_i32_0 : i32, i32
  }
  func.func @transform_7(%arg0: i32) -> (i32, i32) {
    %c0_i32 = arith.constant 0 : i32
    %c0_i32_0 = arith.constant 0 : i32
    %c0_i32_1 = arith.constant 0 : i32
    return %c0_i32, %c0_i32_0 : i32, i32
  }
  func.func @transform_8(%arg0: i32) -> (i32, i32) {
    %c0_i32 = arith.constant 0 : i32
    %c0_i32_0 = arith.constant 0 : i32
    %c0_i32_1 = arith.constant 0 : i32
    return %c0_i32, %c0_i32_0 : i32, i32
  }
  func.func @transform_9(%arg0: i32) -> (i32, i32) {
    %c0_i32 = arith.constant 0 : i32
    %c0_i32_0 = arith.constant 0 : i32
    %c0_i32_1 = arith.constant 0 : i32
    return %c0_i32, %c0_i32_0 : i32, i32
  }
  func.func @transform_10(%arg0: i32) -> (i32, i32) {
    %c0_i32 = arith.constant 0 : i32
    %c0_i32_0 = arith.constant 0 : i32
    return %arg0, %c0_i32 : i32, i32
  }
}

module attributes {stable_mosaic.version = 11 : i64} {
  func.func @_classifier_kernel(%arg0: i32, %arg1: memref<32x32xf32, #tpu.memory_space<vmem>>, %arg2: memref<32x128xbf16, #tpu.memory_space<vmem>>, %arg3: memref<1x128xf32, #tpu.memory_space<vmem>>, %arg4: memref<5x128xbf16, #tpu.memory_space<vmem>>, %arg5: memref<5x1xf32, #tpu.memory_space<vmem>>, %arg6: memref<5x32xf32, #tpu.memory_space<vmem>>) attributes {dimension_semantics = [#tpu.dimension_semantics<parallel>], iteration_bounds = array<i64: 1>, scalar_prefetch = 0 : i64, scratch_operands = 0 : i64, tpu.core_type = #tpu.core_type<tc>, window_params = [{transform_indices = @transform_0, window_bounds = array<i64: 32, 32>}, {pipeline_mode = #tpu.pipeline_mode<synchronous>, transform_indices = @transform_1, window_bounds = array<i64: 32, 128>}, {pipeline_mode = #tpu.pipeline_mode<synchronous>, transform_indices = @transform_2, window_bounds = array<i64: 1, 128>}, {pipeline_mode = #tpu.pipeline_mode<synchronous>, transform_indices = @transform_3, window_bounds = array<i64: 5, 128>}, {pipeline_mode = #tpu.pipeline_mode<synchronous>, transform_indices = @transform_4, window_bounds = array<i64: 5, 1>}, {transform_indices = @transform_5, window_bounds = array<i64: 5, 32>}]} {
    %c0 = arith.constant 0 : index
    %c0_0 = arith.constant 0 : index
    %0 = vector.load %arg1[%c0, %c0_0] : memref<32x32xf32, #tpu.memory_space<vmem>>, vector<32x32xf32>
    %1 = arith.truncf %0 : vector<32x32xf32> to vector<32x32xbf16>
    %c0_1 = arith.constant 0 : index
    %c0_2 = arith.constant 0 : index
    %2 = vector.load %arg2[%c0_1, %c0_2] : memref<32x128xbf16, #tpu.memory_space<vmem>>, vector<32x128xbf16>
    %cst = arith.constant dense<0.000000e+00> : vector<32x128xf32>
    %3 = tpu.matmul %1, %2, %cst {dimension_numbers = #tpu.dot_dimension_numbers<[1], [0], [0], [1], [0, 0, 1, 1], [], []>} : vector<32x32xbf16>, vector<32x128xbf16>, vector<32x128xf32> -> vector<32x128xf32>
    %c0_3 = arith.constant 0 : index
    %c0_4 = arith.constant 0 : index
    %4 = vector.load %arg3[%c0_3, %c0_4] : memref<1x128xf32, #tpu.memory_space<vmem>>, vector<1x128xf32>
    %5 = vector.broadcast %4 : vector<1x128xf32> to vector<32x128xf32>
    %6 = arith.addf %3, %5 : vector<32x128xf32>
    %cst_5 = arith.constant 0.000000e+00 : f32
    %7 = vector.broadcast %cst_5 : f32 to vector<32x128xf32>
    %8 = arith.maximumf %6, %7 : vector<32x128xf32>
    %c0_6 = arith.constant 0 : index
    %c0_7 = arith.constant 0 : index
    %9 = vector.load %arg4[%c0_6, %c0_7] : memref<5x128xbf16, #tpu.memory_space<vmem>>, vector<5x128xbf16>
    %10 = arith.truncf %8 : vector<32x128xf32> to vector<32x128xbf16>
    %cst_8 = arith.constant dense<0.000000e+00> : vector<5x32xf32>
    %11 = tpu.matmul %9, %10, %cst_8 {dimension_numbers = #tpu.dot_dimension_numbers<[1], [1], [0], [0], [0, 0, 1, 0], [], []>} : vector<5x128xbf16>, vector<32x128xbf16>, vector<5x32xf32> -> vector<5x32xf32>
    %c0_9 = arith.constant 0 : index
    %c0_10 = arith.constant 0 : index
    %12 = vector.load %arg5[%c0_9, %c0_10] : memref<5x1xf32, #tpu.memory_space<vmem>>, vector<5x1xf32>
    %13 = vector.broadcast %12 : vector<5x1xf32> to vector<5x32xf32>
    %14 = arith.addf %11, %13 : vector<5x32xf32>
    %c0_11 = arith.constant 0 : index
    %c0_12 = arith.constant 0 : index
    %15 = vector.load %arg6[%c0_11, %c0_12] : memref<5x32xf32, #tpu.memory_space<vmem>>, vector<5x32xf32>
    tpu.vector_store %arg6[%c0_11, %c0_12], %14 {strides = array<i32>} : memref<5x32xf32, #tpu.memory_space<vmem>>, vector<5x32xf32>,
    return
  }
  func.func @transform_0(%arg0: i32) -> (i32, i32) {
    %c0_i32 = arith.constant 0 : i32
    %c0_i32_0 = arith.constant 0 : i32
    return %arg0, %c0_i32 : i32, i32
  }
  func.func @transform_1(%arg0: i32) -> (i32, i32) {
    %c0_i32 = arith.constant 0 : i32
    %c0_i32_0 = arith.constant 0 : i32
    %c0_i32_1 = arith.constant 0 : i32
    return %c0_i32, %c0_i32_0 : i32, i32
  }
  func.func @transform_2(%arg0: i32) -> (i32, i32) {
    %c0_i32 = arith.constant 0 : i32
    %c0_i32_0 = arith.constant 0 : i32
    %c0_i32_1 = arith.constant 0 : i32
    return %c0_i32, %c0_i32_0 : i32, i32
  }
  func.func @transform_3(%arg0: i32) -> (i32, i32) {
    %c0_i32 = arith.constant 0 : i32
    %c0_i32_0 = arith.constant 0 : i32
    %c0_i32_1 = arith.constant 0 : i32
    return %c0_i32, %c0_i32_0 : i32, i32
  }
  func.func @transform_4(%arg0: i32) -> (i32, i32) {
    %c0_i32 = arith.constant 0 : i32
    %c0_i32_0 = arith.constant 0 : i32
    %c0_i32_1 = arith.constant 0 : i32
    return %c0_i32, %c0_i32_0 : i32, i32
  }
  func.func @transform_5(%arg0: i32) -> (i32, i32) {
    %c0_i32 = arith.constant 0 : i32
    %c0_i32_0 = arith.constant 0 : i32
    return %c0_i32, %arg0 : i32, i32
  }
}

</mosaic_0001>

<llo_original>
// kernel: tile.13
$region0: #{tile.13}
  #allocation0 [shape = 's32[1]{0}', space=sflag, size = 0x4, scoped, tag = 'scoped memory for tile.13']
  %s0 = inlined_call_operand.vmem [shape: f32[4], index: 0, kind: input, shape index: {}]
  %s1 = inlined_call_operand.vmem [shape: f32[16,4], index: 1, kind: output, shape index: {}]
  // Predicated region
  $region2: #{tile.13} parent=0 // pred_check
    _
  $region3: #{tile.13} parent=0 // pred_check_branch
    %3 = sbr.rel (0) target = $region5
  $region4: #{tile.13} parent=0 // pred_region
    _
  $region5: #{tile.13} parent=0 // pred_fallthru
    _
  %v4 = vld [vmem:[%s0] ss:$0 sm:$0xff]
  %5 = vst [vmem:[%s1] sm:$0xff] %v4
  %s6 = scalar_lea.vmem %s1, 8
  %7 = vst [vmem:[%s6] sm:$0xff] %v4

// kernel: tile.14
$region0: #{tile.14}
  %s0 = inlined_call_operand.vmem [shape: f32[16,4], index: 0, kind: input, shape index: {}]
  %s1 = inlined_call_operand.vmem [shape: f32[1,64], index: 1, kind: output, shape index: {}]
  $region1: #{tile.14} parent=0
    #allocation0 [shape = 'u8[4096]{0}', space=vmem, size = 0x1000, scoped, tag = 'scoped mem for output reshape']
    %v2 = vld [vmem:[%s0] sm:$0x1]
    %vm3 = vcmask 31744
    %4 = vst.msk [vmem:[#allocation0] sm:$0x1] %vm3, %v2
    %s5 = scalar_lea.vmem %s0, 15
    %v6 = vld [vmem:[%s5] sm:$0x1]
    %7 = vrot.lane.b32.xlu0 %v6, 60
    %v8 = vpop.permute.xlu0 %7
    %vm9 = vcmask 523744
    %10 = vst.msk [vmem:[#allocation0] sm:$0x1] %vm9, %v8
    %s11 = scalar_lea.vmem %s0, 14
    %v12 = vld [vmem:[%s11] sm:$0x1]
    %13 = vrot.lane.b32.xlu0 %v12, 56
    %v14 = vpop.permute.xlu0 %13
    %vm15 = vcmask 490944
    %16 = vst.msk [vmem:[#allocation0] sm:$0x1] %vm15, %v14
    %s17 = scalar_lea.vmem %s0, 13
    %v18 = vld [vmem:[%s17] sm:$0x1]
    %19 = vrot.lane.b32.xlu0 %v18, 52
    %v20 = vpop.permute.xlu0 %19
    %vm21 = vcmask 458144
    %22 = vst.msk [vmem:[#allocation0] sm:$0x1] %vm21, %v20
    %s23 = scalar_lea.vmem %s0, 12
    %v24 = vld [vmem:[%s23] sm:$0x1]
    %25 = vrot.lane.b32.xlu0 %v24, 48
    %v26 = vpop.permute.xlu0 %25
    %vm27 = vcmask 425344
    %28 = vst.msk [vmem:[#allocation0] sm:$0x1] %vm27, %v26
    %s29 = scalar_lea.vmem %s0, 11
    %v30 = vld [vmem:[%s29] sm:$0x1]
    %31 = vrot.lane.b32.xlu0 %v30, 44
    %v32 = vpop.permute.xlu0 %31
    %vm33 = vcmask 392544
    %34 = vst.msk [vmem:[#allocation0] sm:$0x1] %vm33, %v32
    %s35 = scalar_lea.vmem %s0, 10
    %v36 = vld [vmem:[%s35] sm:$0x1]
    %37 = vrot.lane.b32.xlu0 %v36, 40
    %v38 = vpop.permute.xlu0 %37
    %vm39 = vcmask 359744
    %40 = vst.msk [vmem:[#allocation0] sm:$0x1] %vm39, %v38
    %s41 = scalar_lea.vmem %s0, 9
    %v42 = vld [vmem:[%s41] sm:$0x1]
    %43 = vrot.lane.b32.xlu0 %v42, 36
    %v44 = vpop.permute.xlu0 %43
    %vm45 = vcmask 326944
    %46 = vst.msk [vmem:[#allocation0] sm:$0x1] %vm45, %v44
    %s47 = scalar_lea.vmem %s0, 8
    %v48 = vld [vmem:[%s47] sm:$0x1]
    %49 = vrot.lane.b32.xlu0 %v48, 32
    %v50 = vpop.permute.xlu0 %49
    %vm51 = vcmask 294144
    %52 = vst.msk [vmem:[#allocation0] sm:$0x1] %vm51, %v50
    %s53 = scalar_lea.vmem %s0, 7
    %v54 = vld [vmem:[%s53] sm:$0x1]
    %55 = vrot.lane.b32.xlu0 %v54, 28
    %v56 = vpop.permute.xlu0 %55
    %vm57 = vcmask 261344
    %58 = vst.msk [vmem:[#allocation0] sm:$0x1] %vm57, %v56
    %s59 = scalar_lea.vmem %s0, 6
    %v60 = vld [vmem:[%s59] sm:$0x1]
    %61 = vrot.lane.b32.xlu0 %v60, 24
    %v62 = vpop.permute.xlu0 %61
    %vm63 = vcmask 228544
    %64 = vst.msk [vmem:[#allocation0] sm:$0x1] %vm63, %v62
    %s65 = scalar_lea.vmem %s0, 5
    %v66 = vld [vmem:[%s65] sm:$0x1]
    %67 = vrot.lane.b32.xlu0 %v66, 20
    %v68 = vpop.permute.xlu0 %67
    %vm69 = vcmask 195744
    %70 = vst.msk [vmem:[#allocation0] sm:$0x1] %vm69, %v68
    %s71 = scalar_lea.vmem %s0, 4
    %v72 = vld [vmem:[%s71] sm:$0x1]
    %73 = vrot.lane.b32.xlu0 %v72, 16
    %v74 = vpop.permute.xlu0 %73
    %vm75 = vcmask 162944
    %76 = vst.msk [vmem:[#allocation0] sm:$0x1] %vm75, %v74
    %s77 = scalar_lea.vmem %s0, 3
    %v78 = vld [vmem:[%s77] sm:$0x1]
    %79 = vrot.lane.b32.xlu0 %v78, 12
    %v80 = vpop.permute.xlu0 %79
    %vm81 = vcmask 130144
    %82 = vst.msk [vmem:[#allocation0] sm:$0x1] %vm81, %v80
    %s83 = scalar_lea.vmem %s0, 2
    %v84 = vld [vmem:[%s83] sm:$0x1]
    %85 = vrot.lane.b32.xlu0 %v84, 8
    %v86 = vpop.permute.xlu0 %85
    %vm87 = vcmask 97344
    %88 = vst.msk [vmem:[#allocation0] sm:$0x1] %vm87, %v86
    %s89 = scalar_lea.vmem %s0, 1
    %v90 = vld [vmem:[%s89] sm:$0x1]
    %91 = vrot.lane.b32.xlu0 %v90, 4
    %v92 = vpop.permute.xlu0 %91
    %vm93 = vcmask 64544
    %94 = vst.msk [vmem:[#allocation0] sm:$0x1] %vm93, %v92
    %s96 = ssub.s32 2, 1
    %v97 = vld [vmem:[#allocation0] sm:%s96]
    %s99 = ssub.s32 2, 1
    %100 = vst [vmem:[%s1] sm:%s99] %v97

// kernel: cnn_attention_forward.7
$region0: #{cnn_attention_forward.7}
  #allocation0 [shape = 'u32[]', space=smem, size = 0x4, offset = 0x4, fixed_abs, tag = 'smem constant byte address 0x4 - core index']
  #allocation1 [shape = 'u32[72,128]{1,0:T(1,128)}', space=vmem, size = 0x9000, scoped, tag = 'internal scratch']
  %s0 = inlined_call_operand.vmem [shape: f32[32,54], index: 0, kind: input, shape index: {}]
  %s1 = inlined_call_operand.vmem [shape: bf16[54,64], index: 1, kind: input, shape index: {}]
  %s2 = inlined_call_operand.vmem [shape: f32[1,64], index: 2, kind: input, shape index: {}]
  %s3 = inlined_call_operand.vmem [shape: f32[32,64], index: 3, kind: output, shape index: {}]
  %s4 = sld [smem:[#allocation0]]
  $region45: #{cnn_attention_forward.7} parent=0
    _
  %s6 = ssub.s32 1, %s4
  %s7 = scalar_select 0, %s6, %s4
  loop: start=0, step=1, limit=4
  $region2: #{cnn_attention_forward.7} parent=0 // loop_pre_header
    _
  $region3: #{cnn_attention_forward.7} parent=0 // loop_header
    %s9 = sphi 0, %s13
    %p10 = scmp.ge.s32.totalorder %s9, 4
    %s19 = sphi 0, %s21
    %s22 = sphi 0, %s19
    %s23 = sphi 0, %s22
    %s39 = sphi 0, %s23
    %s43 = sphi 0, %s43
    %s45 = sphi 0, %s43
    %s46 = sphi 0, %s45
    %s60 = sphi 0, %s46
    %s64 = sphi 0, %s64
    %s66 = sphi 0, %s64
    %s67 = sphi 0, %s66
    %s81 = sphi 0, %s67
    %s87 = sphi 0, %s89
    %s90 = sphi 0, %s87
    %s91 = sphi 0, %s90
    %s107 = sphi 0, %s91
  $region4: #{cnn_attention_forward.7} parent=0 // loop_header_branch
    %12 = sbr.rel (%p10) target = $region8
  $region5: #{cnn_attention_forward.7} parent=0 // loop_body
    %s14 = ssub.s32 %s9, 1
    %s15 = ssub.s32 %s9, 2
    %s16 = sadd.s32 %s9, 1
    %s17 = ssub.s32 %s9, %s16
    %p18 = scmp.eq.s32.totalorder %s17, 0
    %s20 = sadd.s32 %s19, 1
    %s21 = scalar_select %p18, %s19, %s20
    %p24 = pneg %p18
    %p25 = scmp.eq.s32.totalorder %s9, 1
    %p26 = por %p24, %p25
    %p27 = scmp.ne.s32.totalorder %s19, %s22
    %p28 = scmp.eq.s32.totalorder %s9, 0
    %p29 = por %p27, %p28
    %p30 = scmp.ne.s32.totalorder %s19, %s22
    %p31 = scmp.eq.s32.totalorder %s14, 1
    %p32 = por %p30, %p31
    %p33 = scmp.ne.s32.totalorder %s22, %s23
    %p34 = scmp.eq.s32.totalorder %s14, 0
    %p35 = por %p33, %p34
    %p36 = scmp.ne.s32.totalorder %s22, %s23
    %p37 = scmp.eq.s32.totalorder %s15, 1
    %p38 = por %p36, %p37
    %p40 = scmp.ne.s32.totalorder %s23, %s39
    %p41 = scmp.eq.s32.totalorder %s15, 0
    %p42 = por %p40, %p41
    %s44 = sadd.s32 %s43, 1
    %p47 = scmp.eq.s32.totalorder %s9, 1
    %p48 = scmp.ne.s32.totalorder %s43, %s45
    %p49 = scmp.eq.s32.totalorder %s9, 0
    %p50 = por %p48, %p49
    %p51 = scmp.ne.s32.totalorder %s43, %s45
    %p52 = scmp.eq.s32.totalorder %s14, 1
    %p53 = por %p51, %p52
    %p54 = scmp.ne.s32.totalorder %s45, %s46
    %p55 = scmp.eq.s32.totalorder %s14, 0
    %p56 = por %p54, %p55
    %p57 = scmp.ne.s32.totalorder %s45, %s46
    %p58 = scmp.eq.s32.totalorder %s15, 1
    %p59 = por %p57, %p58
    %p61 = scmp.ne.s32.totalorder %s46, %s60
    %p62 = scmp.eq.s32.totalorder %s15, 0
    %p63 = por %p61, %p62
    %s65 = sadd.s32 %s64, 1
    %p68 = scmp.eq.s32.totalorder %s9, 1
    %p69 = scmp.ne.s32.totalorder %s64, %s66
    %p70 = scmp.eq.s32.totalorder %s9, 0
    %p71 = por %p69, %p70
    %p72 = scmp.ne.s32.totalorder %s64, %s66
    %p73 = scmp.eq.s32.totalorder %s14, 1
    %p74 = por %p72, %p73
    %p75 = scmp.ne.s32.totalorder %s66, %s67
    %p76 = scmp.eq.s32.totalorder %s14, 0
    %p77 = por %p75, %p76
    %p78 = scmp.ne.s32.totalorder %s66, %s67
    %p79 = scmp.eq.s32.totalorder %s15, 1
    %p80 = por %p78, %p79
    %p82 = scmp.ne.s32.totalorder %s67, %s81
    %p83 = scmp.eq.s32.totalorder %s15, 0
    %p84 = por %p82, %p83
    %s85 = ssub.s32 %s9, %s16
    %p86 = scmp.eq.s32.totalorder %s85, 0
    %s88 = sadd.s32 %s87, 1
    %s89 = scalar_select %p86, %s87, %s88
    %p92 = pneg %p86
    %p93 = scmp.eq.s32.totalorder %s9, 1
    %p94 = por %p92, %p93
    %p95 = scmp.ne.s32.totalorder %s87, %s90
    %p96 = scmp.eq.s32.totalorder %s9, 0
    %p97 = por %p95, %p96
    %p98 = scmp.ne.s32.totalorder %s87, %s90
    %p99 = scmp.eq.s32.totalorder %s14, 1
    %p100 = por %p98, %p99
    %p101 = scmp.ne.s32.totalorder %s90, %s91
    %p102 = scmp.eq.s32.totalorder %s14, 0
    %p103 = por %p101, %p102
    %p104 = scmp.ne.s32.totalorder %s90, %s91
    %p105 = scmp.eq.s32.totalorder %s15, 1
    %p106 = por %p104, %p105
    %p108 = scmp.ne.s32.totalorder %s91, %s107
    %p109 = scmp.eq.s32.totalorder %s15, 0
    %p110 = por %p108, %p109
    %p111 = scmp.le.s32.totalorder 1, %s9
    %p112 = scmp.lt.s32.totalorder %s9, 3
    %p113 = pnand %p111, %p112
    %p114 = pneg %p113
    // Predicated region
    $region9: #{cnn_attention_forward.7} parent=5 // pred_check
      _
    $region10: #{cnn_attention_forward.7} parent=5 // pred_check_branch
      %116 = sbr.rel (%p113) target = $region12
    $region11: #{cnn_attention_forward.7} parent=5 // pred_region
      %s117 = ssub.s32 %s9, 1
      // Predicated region
      $region13: #{cnn_attention_forward.7} parent=11 // pred_check
        %p118 = pneg %p56
      $region14: #{cnn_attention_forward.7} parent=11 // pred_check_branch
        %120 = sbr.rel (%p118) target = $region16
      $region15: #{cnn_attention_forward.7} parent=11 // pred_region
        _
      $region16: #{cnn_attention_forward.7} parent=11 // pred_fallthru
        _
      // Predicated region
      $region17: #{cnn_attention_forward.7} parent=11 // pred_check
        %p121 = pneg %p77
      $region18: #{cnn_attention_forward.7} parent=11 // pred_check_branch
        %123 = sbr.rel (%p121) target = $region20
      $region19: #{cnn_attention_forward.7} parent=11 // pred_region
        _
      $region20: #{cnn_attention_forward.7} parent=11 // pred_fallthru
        _
    $region12: #{cnn_attention_forward.7} parent=5 // pred_fallthru
      _
    %p124 = scmp.lt.s32.totalorder %s9, 2
    // Predicated region
    $region21: #{cnn_attention_forward.7} parent=5 // pred_check
      %p125 = pneg %p124
    $region22: #{cnn_attention_forward.7} parent=5 // pred_check_branch
      %127 = sbr.rel (%p125) target = $region24
    $region23: #{cnn_attention_forward.7} parent=5 // pred_region
      // Predicated region
      $region25: #{cnn_attention_forward.7} parent=23 // pred_check
        %p128 = pneg %p29
      $region26: #{cnn_attention_forward.7} parent=23 // pred_check_branch
        %130 = sbr.rel (%p128) target = $region28
      $region27: #{cnn_attention_forward.7} parent=23 // pred_region
        %s131 = smul.u32 2, %s9
        %p132 = scmp.lt.s32.totalorder %s131, 3
        %s133 = scalar_select %p132, %s131, 3
        %s134 = smul.addr %s133, 8
        %s135 = scalar_lea.vmem %s0, %s134
        %s136 = smul.u32 2, %s9
      $region28: #{cnn_attention_forward.7} parent=23 // pred_fallthru
        _
    $region24: #{cnn_attention_forward.7} parent=5 // pred_fallthru
      _
    %p137 = scmp.le.s32.totalorder 1, %s9
    %p138 = scmp.lt.s32.totalorder %s9, 3
    %p139 = pnand %p137, %p138
    %p140 = pneg %p139
    // Predicated region
    $region29: #{cnn_attention_forward.7} parent=5 // pred_check
      _
    $region30: #{cnn_attention_forward.7} parent=5 // pred_check_branch
      %142 = sbr.rel (%p139) target = $region32
    $region31: #{cnn_attention_forward.7} parent=5 // pred_region
      %s143 = ssub.s32 %s9, 1
      %s144 = smul.u32 2, %s14
      %p145 = scmp.lt.s32.totalorder %s144, 3
      %s146 = scalar_select %p145, %s144, 3
      %s147 = smul.addr %s146, 8
      %s148 = scalar_lea.vmem %s0, %s147
      %p149 = pneg %p35
      %p150 = pneg %p32
      %p151 = pneg %p56
      %p152 = pneg %p53
      %p153 = pneg %p77
      %p154 = pneg %p74
      %p155 = pneg %p103
      %p156 = pneg %p100
      %s157 = smul.u32 2, %s14
      %p158 = scmp.lt.s32.totalorder %s157, 3
      %s159 = scalar_select %p158, %s157, 3
      %s160 = smul.addr %s159, 8
      %s161 = scalar_lea.vmem %s3, %s160
      %s162 = smul.u32 2, %s14
      %p163 = scmp.lt.s32.totalorder %s162, 3
      %s164 = scalar_select %p163, %s162, 3
      %s165 = smul.addr %s164, 8
      %s166 = scalar_lea.vmem %s0, %s165
      %s167 = smul.u32 2, %s14
      %s168 = smul.u32 2, %s14
      %p169 = scmp.lt.s32.totalorder %s168, 3
      %s170 = scalar_select %p169, %s168, 3
      %s171 = smul.addr %s170, 8
      %s172 = scalar_lea.vmem %s3, %s171
      %s173 = smul.u32 2, %s14
      %v175 = vld [vmem:[%s166] sm:$0xff]
      %v176 = vld [vmem:[%s166 + $0x8] sm:$0xff]
      %v177 = vpack.c.bf16 %v176, %v175
      %v178 = vld [vmem:[%s1] sm:$0xf]
      %v179 = vld [vmem:[%s1 + $0x4] sm:$0xf]
      %v180 = vld [vmem:[%s1 + $0x8] sm:$0xf]
      %v181 = vld [vmem:[%s1 + $0xc] sm:$0xf]
      %v182 = vld [vmem:[%s1 + $0x10] sm:$0xf]
      %v183 = vld [vmem:[%s1 + $0x14] sm:$0xf]
      %v184 = vld [vmem:[%s1 + $0x18] sm:$0x7]
      %v185 = vld [vmem:[%s2] sm:$0x1]
      %v187 = vperm.slane %v185, 0
      %v196 = vunpack.c.l.b16 %v178
      %v197 = vunpack.c.l.b16 %v179
      %v198 = vunpack.c.l.b16 %v180
      %v199 = vunpack.c.l.b16 %v181
      %v200 = vunpack.c.l.b16 %v182
      %v201 = vunpack.c.l.b16 %v183
      %v202 = vunpack.c.l.b16 %v184
      %v203 = vpack.c.b16 %v197, %v196
      %v204 = vpack.c.b16 %v199, %v198
      %v205 = vpack.c.b16 %v201, %v200
      %v206 = vpack.c.b16 %v202, %v202
      %vm210 = vcmask 441344
      %v212 = vsel %vm210, %v177, 0
      %vm214 = vcmask 1042432
      %v216 = vsel %vm214, %v206, 0
      %218 = vmatpush.bf16.msra.mxu0 0
      %219 = vmatpush.bf16.msra.mxu0 0
      %220 = vmatpush.bf16.msra.mxu0 0
      %221 = vmatpush.bf16.msra.mxu0 0
      %222 = vmatpush.bf16.msra.mxu0 %v216
      %223 = vmatpush.bf16.msra.mxu0 %v205
      %224 = vmatpush.bf16.msra.mxu0 %v204
      %225 = vmatpush.bf16.msra.mxu0 %v203
      %226 = vmatmul.bf16.gmra.mxu0 %v212
      %v227 = vpop.f32.mrf.mxu0
      %v228 = vadd.f32 %v187, %v227
      %v229 = vpop.f32.mrf.mxu0
      %v230 = vadd.f32 %v187, %v229
      %231 = vdwg.mxu0
      %v232 = vmax.f32 %v228, 0.0
      %v233 = vmax.f32 %v230, 0.0
      %vm234 = vcmask 523264
      %235 = vst.msk [vmem:[%s172] sm:$0xff] %vm234, %v232
      %236 = vst.msk [vmem:[%s172 + $0x8] sm:$0xff] %vm234, %v233
      %s237 = smul.u32 2, %s14
      %p238 = scmp.lt.s32.totalorder %s237, 3
      %s239 = scalar_select %p238, %s237, 3
      %s240 = smul.addr %s239, 8
      %s241 = scalar_lea.vmem %s3, %s240
      // Predicated region
      $region33: #{cnn_attention_forward.7} parent=31 // pred_check
        %p242 = pneg %p100
      $region34: #{cnn_attention_forward.7} parent=31 // pred_check_branch
        %244 = sbr.rel (%p242) target = $region36
      $region35: #{cnn_attention_forward.7} parent=31 // pred_region
        %s245 = smul.u32 2, %s14
      $region36: #{cnn_attention_forward.7} parent=31 // pred_fallthru
        _
    $region32: #{cnn_attention_forward.7} parent=5 // pred_fallthru
      _
    %p246 = scmp.le.s32.totalorder 2, %s9
    // Predicated region
    $region37: #{cnn_attention_forward.7} parent=5 // pred_check
      %p247 = pneg %p246
    $region38: #{cnn_attention_forward.7} parent=5 // pred_check_branch
      %249 = sbr.rel (%p247) target = $region40
    $region39: #{cnn_attention_forward.7} parent=5 // pred_region
      %s250 = ssub.s32 %s9, 2
      // Predicated region
      $region41: #{cnn_attention_forward.7} parent=39 // pred_check
        %p251 = pneg %p106
      $region42: #{cnn_attention_forward.7} parent=39 // pred_check_branch
        %253 = sbr.rel (%p251) target = $region44
      $region43: #{cnn_attention_forward.7} parent=39 // pred_region
        %s254 = smul.u32 2, %s15
        %p255 = scmp.lt.s32.totalorder %s254, 3
        %s256 = scalar_select %p255, %s254, 3
        %s257 = smul.addr %s256, 8
        %s258 = scalar_lea.vmem %s3, %s257
      $region44: #{cnn_attention_forward.7} parent=39 // pred_fallthru
        _
    $region40: #{cnn_attention_forward.7} parent=5 // pred_fallthru
      _
  $region6: #{cnn_attention_forward.7} parent=0 // loop_footer
    %s13 = sadd.s32 1, %s9
  $region7: #{cnn_attention_forward.7} parent=0 // loop_footer_branch
    %8 = sbr.rel target = $region3
  $region8: #{cnn_attention_forward.7} parent=0 // loop_exit
    _

// kernel: tile.18
$region0: #{tile.18}
  #allocation0 [shape = 's32[1]{0}', space=sflag, size = 0x4, scoped, tag = 'scoped memory for tile.18']
  %s0 = inlined_call_operand.vmem [shape: f32[8], index: 0, kind: input, shape index: {}]
  %s1 = inlined_call_operand.vmem [shape: f32[16,8], index: 1, kind: output, shape index: {}]
  // Predicated region
  $region2: #{tile.18} parent=0 // pred_check
    _
  $region3: #{tile.18} parent=0 // pred_check_branch
    %3 = sbr.rel (0) target = $region5
  $region4: #{tile.18} parent=0 // pred_region
    _
  $region5: #{tile.18} parent=0 // pred_fallthru
    _
  %v4 = vld [vmem:[%s0] ss:$0 sm:$0xff]
  %5 = vst [vmem:[%s1] sm:$0xff] %v4
  %s6 = scalar_lea.vmem %s1, 8
  %7 = vst [vmem:[%s6] sm:$0xff] %v4

// kernel: tile.19
$region0: #{tile.19}
  %s0 = inlined_call_operand.vmem [shape: f32[16,8], index: 0, kind: input, shape index: {}]
  %s1 = inlined_call_operand.vmem [shape: f32[1,128], index: 1, kind: output, shape index: {}]
  $region1: #{tile.19} parent=0
    #allocation0 [shape = 'u8[4096]{0}', space=vmem, size = 0x1000, scoped, tag = 'scoped mem for output reshape']
    %v2 = vld [vmem:[%s0] sm:$0x1]
    %vm3 = vcmask 64512
    %4 = vst.msk [vmem:[#allocation0] sm:$0x1] %vm3, %v2
    %s5 = scalar_lea.vmem %s0, 15
    %v6 = vld [vmem:[%s5] sm:$0x1]
    %7 = vrot.lane.b32.xlu0 %v6, 120
    %v8 = vpop.permute.xlu0 %7
    %vm9 = vcmask 1048512
    %10 = vst.msk [vmem:[#allocation0] sm:$0x1] %vm9, %v8
    %s11 = scalar_lea.vmem %s0, 14
    %v12 = vld [vmem:[%s11] sm:$0x1]
    %13 = vrot.lane.b32.xlu0 %v12, 112
    %v14 = vpop.permute.xlu0 %13
    %vm15 = vcmask 982912
    %16 = vst.msk [vmem:[#allocation0] sm:$0x1] %vm15, %v14
    %s17 = scalar_lea.vmem %s0, 13
    %v18 = vld [vmem:[%s17] sm:$0x1]
    %19 = vrot.lane.b32.xlu0 %v18, 104
    %v20 = vpop.permute.xlu0 %19
    %vm21 = vcmask 917312
    %22 = vst.msk [vmem:[#allocation0] sm:$0x1] %vm21, %v20
    %s23 = scalar_lea.vmem %s0, 12
    %v24 = vld [vmem:[%s23] sm:$0x1]
    %25 = vrot.lane.b32.xlu0 %v24, 96
    %v26 = vpop.permute.xlu0 %25
    %vm27 = vcmask 851712
    %28 = vst.msk [vmem:[#allocation0] sm:$0x1] %vm27, %v26
    %s29 = scalar_lea.vmem %s0, 11
    %v30 = vld [vmem:[%s29] sm:$0x1]
    %31 = vrot.lane.b32.xlu0 %v30, 88
    %v32 = vpop.permute.xlu0 %31
    %vm33 = vcmask 786112
    %34 = vst.msk [vmem:[#allocation0] sm:$0x1] %vm33, %v32
    %s35 = scalar_lea.vmem %s0, 10
    %v36 = vld [vmem:[%s35] sm:$0x1]
    %37 = vrot.lane.b32.xlu0 %v36, 80
    %v38 = vpop.permute.xlu0 %37
    %vm39 = vcmask 720512
    %40 = vst.msk [vmem:[#allocation0] sm:$0x1] %vm39, %v38
    %s41 = scalar_lea.vmem %s0, 9
    %v42 = vld [vmem:[%s41] sm:$0x1]
    %43 = vrot.lane.b32.xlu0 %v42, 72
    %v44 = vpop.permute.xlu0 %43
    %vm45 = vcmask 654912
    %46 = vst.msk [vmem:[#allocation0] sm:$0x1] %vm45, %v44
    %s47 = scalar_lea.vmem %s0, 8
    %v48 = vld [vmem:[%s47] sm:$0x1]
    %49 = vrot.lane.b32.xlu0 %v48, 64
    %v50 = vpop.permute.xlu0 %49
    %vm51 = vcmask 589312
    %52 = vst.msk [vmem:[#allocation0] sm:$0x1] %vm51, %v50
    %s53 = scalar_lea.vmem %s0, 7
    %v54 = vld [vmem:[%s53] sm:$0x1]
    %55 = vrot.lane.b32.xlu0 %v54, 56
    %v56 = vpop.permute.xlu0 %55
    %vm57 = vcmask 523712
    %58 = vst.msk [vmem:[#allocation0] sm:$0x1] %vm57, %v56
    %s59 = scalar_lea.vmem %s0, 6
    %v60 = vld [vmem:[%s59] sm:$0x1]
    %61 = vrot.lane.b32.xlu0 %v60, 48
    %v62 = vpop.permute.xlu0 %61
    %vm63 = vcmask 458112
    %64 = vst.msk [vmem:[#allocation0] sm:$0x1] %vm63, %v62
    %s65 = scalar_lea.vmem %s0, 5
    %v66 = vld [vmem:[%s65] sm:$0x1]
    %67 = vrot.lane.b32.xlu0 %v66, 40
    %v68 = vpop.permute.xlu0 %67
    %vm69 = vcmask 392512
    %70 = vst.msk [vmem:[#allocation0] sm:$0x1] %vm69, %v68
    %s71 = scalar_lea.vmem %s0, 4
    %v72 = vld [vmem:[%s71] sm:$0x1]
    %73 = vrot.lane.b32.xlu0 %v72, 32
    %v74 = vpop.permute.xlu0 %73
    %vm75 = vcmask 326912
    %76 = vst.msk [vmem:[#allocation0] sm:$0x1] %vm75, %v74
    %s77 = scalar_lea.vmem %s0, 3
    %v78 = vld [vmem:[%s77] sm:$0x1]
    %79 = vrot.lane.b32.xlu0 %v78, 24
    %v80 = vpop.permute.xlu0 %79
    %vm81 = vcmask 261312
    %82 = vst.msk [vmem:[#allocation0] sm:$0x1] %vm81, %v80
    %s83 = scalar_lea.vmem %s0, 2
    %v84 = vld [vmem:[%s83] sm:$0x1]
    %85 = vrot.lane.b32.xlu0 %v84, 16
    %v86 = vpop.permute.xlu0 %85
    %vm87 = vcmask 195712
    %88 = vst.msk [vmem:[#allocation0] sm:$0x1] %vm87, %v86
    %s89 = scalar_lea.vmem %s0, 1
    %v90 = vld [vmem:[%s89] sm:$0x1]
    %91 = vrot.lane.b32.xlu0 %v90, 8
    %v92 = vpop.permute.xlu0 %91
    %vm93 = vcmask 130112
    %94 = vst.msk [vmem:[#allocation0] sm:$0x1] %vm93, %v92
    %s96 = ssub.s32 2, 1
    %v97 = vld [vmem:[#allocation0] sm:%s96]
    %s99 = ssub.s32 2, 1
    %100 = vst [vmem:[%s1] sm:%s99] %v97

// kernel: cnn_attention_forward.8
$region0: #{cnn_attention_forward.8}
  #allocation0 [shape = 'u32[]', space=smem, size = 0x4, offset = 0x4, fixed_abs, tag = 'smem constant byte address 0x4 - core index']
  #allocation1 [shape = 'u32[72,128]{1,0:T(1,128)}', space=vmem, size = 0x9000, scoped, tag = 'internal scratch']
  %s0 = inlined_call_operand.vmem [shape: f32[8,216], index: 0, kind: input, shape index: {}]
  %s1 = inlined_call_operand.vmem [shape: bf16[216,128], index: 1, kind: input, shape index: {}]
  %s2 = inlined_call_operand.vmem [shape: f32[1,128], index: 2, kind: input, shape index: {}]
  %s3 = inlined_call_operand.vmem [shape: f32[8,128], index: 3, kind: output, shape index: {}]
  %s4 = sld [smem:[#allocation0]]
  $region22: #{cnn_attention_forward.8} parent=0
    _
  %s6 = ssub.s32 1, %s4
  %s7 = scalar_select 0, %s6, %s4
  // Predicated region
  $region2: #{cnn_attention_forward.8} parent=0 // pred_check
    _
  $region3: #{cnn_attention_forward.8} parent=0 // pred_check_branch
    %9 = sbr.rel (0) target = $region5
  $region4: #{cnn_attention_forward.8} parent=0 // pred_region
    _
  $region5: #{cnn_attention_forward.8} parent=0 // pred_fallthru
    _
  // Predicated region
  $region6: #{cnn_attention_forward.8} parent=0 // pred_check
    _
  $region7: #{cnn_attention_forward.8} parent=0 // pred_check_branch
    %11 = sbr.rel (0) target = $region9
  $region8: #{cnn_attention_forward.8} parent=0 // pred_region
    _
  $region9: #{cnn_attention_forward.8} parent=0 // pred_fallthru
    _
  // Predicated region
  $region10: #{cnn_attention_forward.8} parent=0 // pred_check
    _
  $region11: #{cnn_attention_forward.8} parent=0 // pred_check_branch
    %13 = sbr.rel (0) target = $region13
  $region12: #{cnn_attention_forward.8} parent=0 // pred_region
    _
  $region13: #{cnn_attention_forward.8} parent=0 // pred_fallthru
    _
  %v15 = vld [vmem:[%s0] sm:$0xff]
  %v16 = vld [vmem:[%s0 + $0x8] sm:$0xff]
  %v17 = vpack.c.bf16 %v15, %v15
  %v18 = vpack.c.bf16 %v16, %v16
  %v19 = vld [vmem:[%s1] sm:$0xf]
  %v20 = vld [vmem:[%s1 + $0x4] sm:$0xf]
  %v21 = vld [vmem:[%s1 + $0x8] sm:$0xf]
  %v22 = vld [vmem:[%s1 + $0xc] sm:$0xf]
  %v23 = vld [vmem:[%s1 + $0x10] sm:$0xf]
  %v24 = vld [vmem:[%s1 + $0x14] sm:$0xf]
  %v25 = vld [vmem:[%s1 + $0x18] sm:$0xf]
  %v26 = vld [vmem:[%s1 + $0x1c] sm:$0xf]
  %v27 = vld [vmem:[%s1 + $0x20] sm:$0xf]
  %v28 = vld [vmem:[%s1 + $0x24] sm:$0xf]
  %v29 = vld [vmem:[%s1 + $0x28] sm:$0xf]
  %v30 = vld [vmem:[%s1 + $0x2c] sm:$0xf]
  %v31 = vld [vmem:[%s1 + $0x30] sm:$0xf]
  %v32 = vld [vmem:[%s1 + $0x34] sm:$0xf]
  %v33 = vld [vmem:[%s1 + $0x38] sm:$0xf]
  %v34 = vld [vmem:[%s1 + $0x3c] sm:$0xf]
  %v35 = vld [vmem:[%s1 + $0x40] sm:$0xf]
  %v36 = vld [vmem:[%s1 + $0x44] sm:$0xf]
  %v37 = vld [vmem:[%s1 + $0x48] sm:$0xf]
  %v38 = vld [vmem:[%s1 + $0x4c] sm:$0xf]
  %v39 = vld [vmem:[%s1 + $0x50] sm:$0xf]
  %v40 = vld [vmem:[%s1 + $0x54] sm:$0xf]
  %v41 = vld [vmem:[%s1 + $0x58] sm:$0xf]
  %v42 = vld [vmem:[%s1 + $0x5c] sm:$0xf]
  %v43 = vld [vmem:[%s1 + $0x60] sm:$0xf]
  %v44 = vld [vmem:[%s1 + $0x64] sm:$0xf]
  %v45 = vld [vmem:[%s1 + $0x68] sm:$0xf]
  %v46 = vld [vmem:[%s2] sm:$0x1]
  %v48 = vperm.slane %v46, 0
  %v77 = vunpack.c.l.b16 %v19
  %v78 = vunpack.c.l.b16 %v20
  %v79 = vunpack.c.l.b16 %v21
  %v80 = vunpack.c.l.b16 %v22
  %v81 = vunpack.c.l.b16 %v23
  %v82 = vunpack.c.l.b16 %v24
  %v83 = vunpack.c.l.b16 %v25
  %v84 = vunpack.c.l.b16 %v26
  %v85 = vunpack.c.l.b16 %v27
  %v86 = vunpack.c.l.b16 %v28
  %v87 = vunpack.c.l.b16 %v29
  %v88 = vunpack.c.l.b16 %v30
  %v89 = vunpack.c.l.b16 %v31
  %v90 = vunpack.c.l.b16 %v32
  %v91 = vunpack.c.l.b16 %v33
  %v92 = vunpack.c.l.b16 %v34
  %v93 = vunpack.c.l.b16 %v35
  %v94 = vunpack.c.l.b16 %v36
  %v95 = vunpack.c.l.b16 %v37
  %v96 = vunpack.c.l.b16 %v38
  %v97 = vunpack.c.l.b16 %v39
  %v98 = vunpack.c.l.b16 %v40
  %v99 = vunpack.c.l.b16 %v41
  %v100 = vunpack.c.l.b16 %v42
  %v101 = vunpack.c.l.b16 %v43
  %v102 = vunpack.c.l.b16 %v44
  %v103 = vunpack.c.l.b16 %v45
  %v104 = vpack.c.b16 %v78, %v77
  %v105 = vpack.c.b16 %v80, %v79
  %v106 = vpack.c.b16 %v82, %v81
  %v107 = vpack.c.b16 %v84, %v83
  %v108 = vpack.c.b16 %v86, %v85
  %v109 = vpack.c.b16 %v88, %v87
  %v110 = vpack.c.b16 %v90, %v89
  %v111 = vpack.c.b16 %v92, %v91
  %v112 = vpack.c.b16 %v94, %v93
  %v113 = vpack.c.b16 %v96, %v95
  %v114 = vpack.c.b16 %v98, %v97
  %v115 = vpack.c.b16 %v100, %v99
  %v116 = vpack.c.b16 %v102, %v101
  %v117 = vpack.c.b16 %v103, %v103
  %vm131 = vcmask 719872
  %v133 = vsel %vm131, %v18, 0
  %vm135 = vcmask 1043456
  %v137 = vsel %vm135, %v117, 0
  %139 = vmatpush.bf16.msra.mxu0 %v111
  %140 = vmatpush.bf16.msra.mxu0 %v110
  %141 = vmatpush.bf16.msra.mxu0 %v109
  %142 = vmatpush.bf16.msra.mxu0 %v108
  %143 = vmatpush.bf16.msra.mxu0 %v107
  %144 = vmatpush.bf16.msra.mxu0 %v106
  %145 = vmatpush.bf16.msra.mxu0 %v105
  %146 = vmatpush.bf16.msra.mxu0 %v104
  %147 = vmatmul.bf16.gmra.mxu0 %v17
  %v148 = vpop.f32.mrf.mxu0
  %v149 = vadd.f32 %v48, %v148
  %v150 = vpop.f32.mrf.mxu0
  %151 = vdwg.mxu0
  %152 = vmatpush.bf16.msra.mxu0 0
  %153 = vmatpush.bf16.msra.mxu0 0
  %154 = vmatpush.bf16.msra.mxu0 %v137
  %155 = vmatpush.bf16.msra.mxu0 %v116
  %156 = vmatpush.bf16.msra.mxu0 %v115
  %157 = vmatpush.bf16.msra.mxu0 %v114
  %158 = vmatpush.bf16.msra.mxu0 %v113
  %159 = vmatpush.bf16.msra.mxu0 %v112
  %160 = vmatmul.bf16.gmra.mxu0 %v133
  %v161 = vpop.f32.mrf.mxu0
  %v162 = vadd.f32 %v149, %v161
  %v163 = vpop.f32.mrf.mxu0
  %164 = vdwg.mxu0
  %v165 = vmax.f32 %v162, 0.0
  %166 = vst [vmem:[%s3] sm:$0xff] %v165
  // Predicated region
  $region14: #{cnn_attention_forward.8} parent=0 // pred_check
    _
  $region15: #{cnn_attention_forward.8} parent=0 // pred_check_branch
    %168 = sbr.rel (0) target = $region17
  $region16: #{cnn_attention_forward.8} parent=0 // pred_region
    _
  $region17: #{cnn_attention_forward.8} parent=0 // pred_fallthru
    _
  // Predicated region
  $region18: #{cnn_attention_forward.8} parent=0 // pred_check
    _
  $region19: #{cnn_attention_forward.8} parent=0 // pred_check_branch
    %170 = sbr.rel (0) target = $region21
  $region20: #{cnn_attention_forward.8} parent=0 // pred_region
    _
  $region21: #{cnn_attention_forward.8} parent=0 // pred_fallthru
    _

// kernel: cnn_attention_forward.9
$region0: #{cnn_attention_forward.9}
  #allocation0 [shape = 'u32[]', space=smem, size = 0x4, offset = 0x4, fixed_abs, tag = 'smem constant byte address 0x4 - core index']
  #allocation1 [shape = 'u32[72,128]{1,0:T(1,128)}', space=vmem, size = 0x9000, scoped, tag = 'internal scratch']
  %s0 = inlined_call_operand.vmem [shape: f32[2,16,32], index: 0, kind: input, shape index: {}]
  %s1 = inlined_call_operand.vmem [shape: f32[1,32], index: 1, kind: input, shape index: {}]
  %s2 = inlined_call_operand.vmem [shape: f32[1,32], index: 2, kind: input, shape index: {}]
  %s3 = inlined_call_operand.vmem [shape: bf16[32,96], index: 3, kind: input, shape index: {}]
  %s4 = inlined_call_operand.vmem [shape: f32[1,96], index: 4, kind: input, shape index: {}]
  %s5 = inlined_call_operand.vmem [shape: bf16[2,16,32], index: 5, kind: output, shape index: {}]
  %s6 = sld [smem:[#allocation0]]
  $region53: #{cnn_attention_forward.9} parent=0
    _
  %s8 = ssub.s32 1, %s6
  %s9 = scalar_select 0, %s8, %s6
  loop: start=0, step=1, limit=4
  $region2: #{cnn_attention_forward.9} parent=0 // loop_pre_header
    _
  $region3: #{cnn_attention_forward.9} parent=0 // loop_header
    %s11 = sphi 0, %s15
    %p12 = scmp.ge.s32.totalorder %s11, 4
    %s21 = sphi 0, %s23
    %s24 = sphi 0, %s21
    %s25 = sphi 0, %s24
    %s41 = sphi 0, %s25
    %s45 = sphi 0, %s45
    %s47 = sphi 0, %s45
    %s48 = sphi 0, %s47
    %s62 = sphi 0, %s48
    %s66 = sphi 0, %s66
    %s68 = sphi 0, %s66
    %s69 = sphi 0, %s68
    %s83 = sphi 0, %s69
    %s87 = sphi 0, %s87
    %s89 = sphi 0, %s87
    %s90 = sphi 0, %s89
    %s104 = sphi 0, %s90
    %s108 = sphi 0, %s108
    %s110 = sphi 0, %s108
    %s111 = sphi 0, %s110
    %s125 = sphi 0, %s111
    %s131 = sphi 0, %s133
    %s134 = sphi 0, %s131
    %s135 = sphi 0, %s134
    %s151 = sphi 0, %s135
  $region4: #{cnn_attention_forward.9} parent=0 // loop_header_branch
    %14 = sbr.rel (%p12) target = $region8
  $region5: #{cnn_attention_forward.9} parent=0 // loop_body
    %s16 = ssub.s32 %s11, 1
    %s17 = ssub.s32 %s11, 2
    %s18 = sadd.s32 %s11, 1
    %s19 = ssub.s32 %s11, %s18
    %p20 = scmp.eq.s32.totalorder %s19, 0
    %s22 = sadd.s32 %s21, 1
    %s23 = scalar_select %p20, %s21, %s22
    %p26 = pneg %p20
    %p27 = scmp.eq.s32.totalorder %s11, 1
    %p28 = por %p26, %p27
    %p29 = scmp.ne.s32.totalorder %s21, %s24
    %p30 = scmp.eq.s32.totalorder %s11, 0
    %p31 = por %p29, %p30
    %p32 = scmp.ne.s32.totalorder %s21, %s24
    %p33 = scmp.eq.s32.totalorder %s16, 1
    %p34 = por %p32, %p33
    %p35 = scmp.ne.s32.totalorder %s24, %s25
    %p36 = scmp.eq.s32.totalorder %s16, 0
    %p37 = por %p35, %p36
    %p38 = scmp.ne.s32.totalorder %s24, %s25
    %p39 = scmp.eq.s32.totalorder %s17, 1
    %p40 = por %p38, %p39
    %p42 = scmp.ne.s32.totalorder %s25, %s41
    %p43 = scmp.eq.s32.totalorder %s17, 0
    %p44 = por %p42, %p43
    %s46 = sadd.s32 %s45, 1
    %p49 = scmp.eq.s32.totalorder %s11, 1
    %p50 = scmp.ne.s32.totalorder %s45, %s47
    %p51 = scmp.eq.s32.totalorder %s11, 0
    %p52 = por %p50, %p51
    %p53 = scmp.ne.s32.totalorder %s45, %s47
    %p54 = scmp.eq.s32.totalorder %s16, 1
    %p55 = por %p53, %p54
    %p56 = scmp.ne.s32.totalorder %s47, %s48
    %p57 = scmp.eq.s32.totalorder %s16, 0
    %p58 = por %p56, %p57
    %p59 = scmp.ne.s32.totalorder %s47, %s48
    %p60 = scmp.eq.s32.totalorder %s17, 1
    %p61 = por %p59, %p60
    %p63 = scmp.ne.s32.totalorder %s48, %s62
    %p64 = scmp.eq.s32.totalorder %s17, 0
    %p65 = por %p63, %p64
    %s67 = sadd.s32 %s66, 1
    %p70 = scmp.eq.s32.totalorder %s11, 1
    %p71 = scmp.ne.s32.totalorder %s66, %s68
    %p72 = scmp.eq.s32.totalorder %s11, 0
    %p73 = por %p71, %p72
    %p74 = scmp.ne.s32.totalorder %s66, %s68
    %p75 = scmp.eq.s32.totalorder %s16, 1
    %p76 = por %p74, %p75
    %p77 = scmp.ne.s32.totalorder %s68, %s69
    %p78 = scmp.eq.s32.totalorder %s16, 0
    %p79 = por %p77, %p78
    %p80 = scmp.ne.s32.totalorder %s68, %s69
    %p81 = scmp.eq.s32.totalorder %s17, 1
    %p82 = por %p80, %p81
    %p84 = scmp.ne.s32.totalorder %s69, %s83
    %p85 = scmp.eq.s32.totalorder %s17, 0
    %p86 = por %p84, %p85
    %s88 = sadd.s32 %s87, 1
    %p91 = scmp.eq.s32.totalorder %s11, 1
    %p92 = scmp.ne.s32.totalorder %s87, %s89
    %p93 = scmp.eq.s32.totalorder %s11, 0
    %p94 = por %p92, %p93
    %p95 = scmp.ne.s32.totalorder %s87, %s89
    %p96 = scmp.eq.s32.totalorder %s16, 1
    %p97 = por %p95, %p96
    %p98 = scmp.ne.s32.totalorder %s89, %s90
    %p99 = scmp.eq.s32.totalorder %s16, 0
    %p100 = por %p98, %p99
    %p101 = scmp.ne.s32.totalorder %s89, %s90
    %p102 = scmp.eq.s32.totalorder %s17, 1
    %p103 = por %p101, %p102
    %p105 = scmp.ne.s32.totalorder %s90, %s104
    %p106 = scmp.eq.s32.totalorder %s17, 0
    %p107 = por %p105, %p106
    %s109 = sadd.s32 %s108, 1
    %p112 = scmp.eq.s32.totalorder %s11, 1
    %p113 = scmp.ne.s32.totalorder %s108, %s110
    %p114 = scmp.eq.s32.totalorder %s11, 0
    %p115 = por %p113, %p114
    %p116 = scmp.ne.s32.totalorder %s108, %s110
    %p117 = scmp.eq.s32.totalorder %s16, 1
    %p118 = por %p116, %p117
    %p119 = scmp.ne.s32.totalorder %s110, %s111
    %p120 = scmp.eq.s32.totalorder %s16, 0
    %p121 = por %p119, %p120
    %p122 = scmp.ne.s32.totalorder %s110, %s111
    %p123 = scmp.eq.s32.totalorder %s17, 1
    %p124 = por %p122, %p123
    %p126 = scmp.ne.s32.totalorder %s111, %s125
    %p127 = scmp.eq.s32.totalorder %s17, 0
    %p128 = por %p126, %p127
    %s129 = ssub.s32 %s11, %s18
    %p130 = scmp.eq.s32.totalorder %s129, 0
    %s132 = sadd.s32 %s131, 1
    %s133 = scalar_select %p130, %s131, %s132
    %p136 = pneg %p130
    %p137 = scmp.eq.s32.totalorder %s11, 1
    %p138 = por %p136, %p137
    %p139 = scmp.ne.s32.totalorder %s131, %s134
    %p140 = scmp.eq.s32.totalorder %s11, 0
    %p141 = por %p139, %p140
    %p142 = scmp.ne.s32.totalorder %s131, %s134
    %p143 = scmp.eq.s32.totalorder %s16, 1
    %p144 = por %p142, %p143
    %p145 = scmp.ne.s32.totalorder %s134, %s135
    %p146 = scmp.eq.s32.totalorder %s16, 0
    %p147 = por %p145, %p146
    %p148 = scmp.ne.s32.totalorder %s134, %s135
    %p149 = scmp.eq.s32.totalorder %s17, 1
    %p150 = por %p148, %p149
    %p152 = scmp.ne.s32.totalorder %s135, %s151
    %p153 = scmp.eq.s32.totalorder %s17, 0
    %p154 = por %p152, %p153
    %p155 = scmp.le.s32.totalorder 1, %s11
    %p156 = scmp.lt.s32.totalorder %s11, 3
    %p157 = pnand %p155, %p156
    %p158 = pneg %p157
    // Predicated region
    $region9: #{cnn_attention_forward.9} parent=5 // pred_check
      _
    $region10: #{cnn_attention_forward.9} parent=5 // pred_check_branch
      %160 = sbr.rel (%p157) target = $region12
    $region11: #{cnn_attention_forward.9} parent=5 // pred_region
      %s161 = ssub.s32 %s11, 1
      // Predicated region
      $region13: #{cnn_attention_forward.9} parent=11 // pred_check
        %p162 = pneg %p58
      $region14: #{cnn_attention_forward.9} parent=11 // pred_check_branch
        %164 = sbr.rel (%p162) target = $region16
      $region15: #{cnn_attention_forward.9} parent=11 // pred_region
        _
      $region16: #{cnn_attention_forward.9} parent=11 // pred_fallthru
        _
      // Predicated region
      $region17: #{cnn_attention_forward.9} parent=11 // pred_check
        %p165 = pneg %p79
      $region18: #{cnn_attention_forward.9} parent=11 // pred_check_branch
        %167 = sbr.rel (%p165) target = $region20
      $region19: #{cnn_attention_forward.9} parent=11 // pred_region
        _
      $region20: #{cnn_attention_forward.9} parent=11 // pred_fallthru
        _
      // Predicated region
      $region21: #{cnn_attention_forward.9} parent=11 // pred_check
        %p168 = pneg %p100
      $region22: #{cnn_attention_forward.9} parent=11 // pred_check_branch
        %170 = sbr.rel (%p168) target = $region24
      $region23: #{cnn_attention_forward.9} parent=11 // pred_region
        _
      $region24: #{cnn_attention_forward.9} parent=11 // pred_fallthru
        _
      // Predicated region
      $region25: #{cnn_attention_forward.9} parent=11 // pred_check
        %p171 = pneg %p121
      $region26: #{cnn_attention_forward.9} parent=11 // pred_check_branch
        %173 = sbr.rel (%p171) target = $region28
      $region27: #{cnn_attention_forward.9} parent=11 // pred_region
        _
      $region28: #{cnn_attention_forward.9} parent=11 // pred_fallthru
        _
    $region12: #{cnn_attention_forward.9} parent=5 // pred_fallthru
      _
    %p174 = scmp.lt.s32.totalorder %s11, 2
    // Predicated region
    $region29: #{cnn_attention_forward.9} parent=5 // pred_check
      %p175 = pneg %p174
    $region30: #{cnn_attention_forward.9} parent=5 // pred_check_branch
      %177 = sbr.rel (%p175) target = $region32
    $region31: #{cnn_attention_forward.9} parent=5 // pred_region
      // Predicated region
      $region33: #{cnn_attention_forward.9} parent=31 // pred_check
        %p178 = pneg %p31
      $region34: #{cnn_attention_forward.9} parent=31 // pred_check_branch
        %180 = sbr.rel (%p178) target = $region36
      $region35: #{cnn_attention_forward.9} parent=31 // pred_region
        %p181 = scmp.lt.s32.totalorder %s11, 1
        %s182 = scalar_select %p181, %s11, 1
        %s183 = smul.addr %s182, 2
        %s184 = smul.addr %s183, 8
        %s185 = scalar_lea.vmem %s0, %s184
      $region36: #{cnn_attention_forward.9} parent=31 // pred_fallthru
        _
    $region32: #{cnn_attention_forward.9} parent=5 // pred_fallthru
      _
    %p186 = scmp.le.s32.totalorder 1, %s11
    %p187 = scmp.lt.s32.totalorder %s11, 3
    %p188 = pnand %p186, %p187
    %p189 = pneg %p188
    // Predicated region
    $region37: #{cnn_attention_forward.9} parent=5 // pred_check
      _
    $region38: #{cnn_attention_forward.9} parent=5 // pred_check_branch
      %191 = sbr.rel (%p188) target = $region40
    $region39: #{cnn_attention_forward.9} parent=5 // pred_region
      %s192 = ssub.s32 %s11, 1
      %p193 = scmp.lt.s32.totalorder %s16, 1
      %s194 = scalar_select %p193, %s16, 1
      %s195 = smul.addr %s194, 2
      %s196 = smul.addr %s195, 8
      %s197 = scalar_lea.vmem %s0, %s196
      %p198 = pneg %p37
      %p199 = pneg %p34
      %p200 = pneg %p58
      %p201 = pneg %p55
      %p202 = pneg %p79
      %p203 = pneg %p76
      %p204 = pneg %p100
      %p205 = pneg %p97
      %p206 = pneg %p121
      %p207 = pneg %p118
      %p208 = pneg %p147
      %p209 = pneg %p144
      %p210 = scmp.lt.s32.totalorder %s16, 1
      %s211 = scalar_select %p210, %s16, 1
      %s212 = smul.addr %s211, 2
      %s213 = smul.addr %s212, 4
      %s214 = scalar_lea.vmem %s5, %s213
      %p215 = scmp.lt.s32.totalorder %s16, 1
      %s216 = scalar_select %p215, %s16, 1
      %s217 = smul.addr %s216, 2
      %s218 = smul.addr %s217, 8
      %s219 = scalar_lea.vmem %s0, %s218
      %p220 = scmp.lt.s32.totalorder %s16, 1
      %s221 = scalar_select %p220, %s16, 1
      %s222 = smul.addr %s221, 2
      %s223 = smul.addr %s222, 4
      %s224 = scalar_lea.vmem %s5, %s223
      %v226 = vld [vmem:[%s219] sm:$0xff]
      %v227 = vld [vmem:[%s219 + $0x8] sm:$0xff]
      %vm228 = vcmask 261120
      %v229 = vsel %vm228, %v226, 0.0
      %230 = vadd.xlane.f32.xlu0 %v229
      %v231 = vpop.xlane.xlu0 %230
      %v232 = vsel %vm228, %v227, 0.0
      %233 = vadd.xlane.f32.xlu0 %v232
      %v234 = vpop.xlane.xlu0 %233
      %v235 = vrcp.pop 32.0
      %v236 = vmul.f32 32.0, %v235
      %v237 = vsub.f32 1.0, %v236
      %v238 = vmul.f32 %v235, %v237
      %v239 = vadd.f32 %v235, %v238
      %vm240 = vweird.f32 %v235
      %v241 = vsel %vm240, %v235, %v239
      %v242 = vmul.f32 %v231, %v241
      %v243 = vmul.f32 %v234, %v241
      %v244 = vsub.f32 %v226, %v242
      %v245 = vsub.f32 %v227, %v243
      %v246 = vmul.f32 %v244, %v244
      %v247 = vmul.f32 %v245, %v245
      %v248 = vsel %vm228, %v246, 0.0
      %249 = vadd.xlane.f32.xlu0 %v248
      %v250 = vpop.xlane.xlu0 %249
      %v251 = vsel %vm228, %v247, 0.0
      %252 = vadd.xlane.f32.xlu0 %v251
      %v253 = vpop.xlane.xlu0 %252
      %v254 = vmul.f32 %v250, %v241
      %v255 = vmul.f32 %v253, %v241
      %v256 = vadd.f32 %v254, 1e-05
      %v257 = vadd.f32 %v255, 1e-05
      %v258 = vrsqrt.pop %v256
      %v259 = vmul.f32 %v258, %v256
      %v260 = vmul.f32 %v259, %v258
      %v261 = vmul.f32 0.5, %v260
      %v262 = vsub.f32 1.5, %v261
      %v263 = vmul.f32 %v258, %v262
      %vm264 = vweird.f32 %v256
      %vm265 = vweird.f32 %v258
      %vm266 = vmor %vm264, %vm265
      %v267 = vsel %vm266, %v258, %v263
      %v268 = vrsqrt.pop %v257
      %v269 = vmul.f32 %v268, %v257
      %v270 = vmul.f32 %v269, %v268
      %v271 = vmul.f32 0.5, %v270
      %v272 = vsub.f32 1.5, %v271
      %v273 = vmul.f32 %v268, %v272
      %vm274 = vweird.f32 %v257
      %vm275 = vweird.f32 %v268
      %vm276 = vmor %vm274, %vm275
      %v277 = vsel %vm276, %v268, %v273
      %v278 = vmul.f32 %v244, %v267
      %v279 = vmul.f32 %v245, %v277
      %v280 = vld [vmem:[%s1] sm:$0x1]
      %v282 = vperm.slane %v280, 0
      %v284 = vmul.f32 %v278, %v282
      %v285 = vmul.f32 %v279, %v282
      %v286 = vld [vmem:[%s2] sm:$0x1]
      %v288 = vperm.slane %v286, 0
      %v290 = vadd.f32 %v284, %v288
      %v291 = vadd.f32 %v285, %v288
      %v292 = vpack.c.bf16 %v291, %v290
      %v293 = vld [vmem:[%s3] sm:$0xf]
      %v294 = vld [vmem:[%s3 + $0x4] sm:$0xf]
      %v295 = vld [vmem:[%s3 + $0x8] sm:$0xf]
      %v296 = vld [vmem:[%s3 + $0xc] sm:$0xf]
      %v297 = vld [vmem:[%s4] sm:$0x1]
      %v299 = vperm.slane %v297, 0
      %v305 = vunpack.c.l.b16 %v293
      %v306 = vunpack.c.l.b16 %v294
      %v307 = vunpack.c.l.b16 %v295
      %v308 = vunpack.c.l.b16 %v296
      %v309 = vpack.c.b16 %v306, %v305
      %v310 = vpack.c.b16 %v308, %v307
      %v314 = vsel %vm228, %v292, 0
      %316 = vmatpush.bf16.msra.mxu0 0
      %317 = vmatpush.bf16.msra.mxu0 0
      %318 = vmatpush.bf16.msra.mxu0 0
      %319 = vmatpush.bf16.msra.mxu0 0
      %320 = vmatpush.bf16.msra.mxu0 0
      %321 = vmatpush.bf16.msra.mxu0 0
      %322 = vmatpush.bf16.msra.mxu0 %v310
      %323 = vmatpush.bf16.msra.mxu0 %v309
      %324 = vmatmul.bf16.gmra.mxu0 %v314
      %v325 = vpop.f32.mrf.mxu0
      %v326 = vadd.f32 %v299, %v325
      %v327 = vpop.f32.mrf.mxu0
      %v328 = vadd.f32 %v299, %v327
      %329 = vdwg.mxu0
      %v330 = vmul.f32 %v326, 0.35355338
      %v331 = vmul.f32 %v328, 0.35355338
      %v332 = vpack.c.bf16 %v331, %v330
      %v333 = vpack.c.bf16 %v328, %v326
      %335 = vrot.lane.b32.xlu0 %v333, 96
      %v336 = vpop.permute.xlu0 %335
      %vm337 = vcmask 64512
      %v339 = vsel %vm337, %v332, 0
      %v342 = vsel %vm337, %v336, 0
      %344 = vmatpush.bf16.xpose.msra.mxu0 0
      %345 = vmatpush.bf16.xpose.msra.mxu0 0
      %346 = vmatpush.bf16.xpose.msra.mxu0 0
      %347 = vmatpush.bf16.xpose.msra.mxu0 0
      %348 = vmatpush.bf16.xpose.msra.mxu0 0
      %349 = vmatpush.bf16.xpose.msra.mxu0 0
      %350 = vmatpush.bf16.xpose.msra.mxu0 0
      %351 = vmatpush.bf16.xpose.msra.mxu0 %v342
      %352 = vmatmul.bf16.gmra.mxu0 %v339
      %v353 = vpop.f32.mrf.mxu0
      %v354 = vadd.f32 0.0, %v353
      %v355 = vpop.f32.mrf.mxu0
      %v356 = vadd.f32 0.0, %v355
      %357 = vdwg.mxu0
      %vm358 = vcmask 130048
      %v359 = vsel %vm358, %v354, -inf
      %360 = vmax.xlane.f32.xlu0 %v359
      %v361 = vpop.xlane.xlu0 %360
      %v362 = vsel %vm358, %v356, -inf
      %363 = vmax.xlane.f32.xlu0 %v362
      %v364 = vpop.xlane.xlu0 %363
      %v365 = vsub.f32 %v354, %v361
      %v366 = vsub.f32 %v356, %v364
      %v367 = vmul.f32 %v365, 1.442695
      %v368 = vpow.pop %v367
      %v369 = vmul.f32 %v366, 1.442695
      %v370 = vpow.pop %v369
      %v371 = vsel %vm358, %v368, 0.0
      %372 = vadd.xlane.f32.xlu0 %v371
      %v373 = vpop.xlane.xlu0 %372
      %v374 = vsel %vm358, %v370, 0.0
      %375 = vadd.xlane.f32.xlu0 %v374
      %v376 = vpop.xlane.xlu0 %375
      %v377 = vrcp.pop %v373
      %v378 = vmul.f32 %v373, %v377
      %v379 = vsub.f32 1.0, %v378
      %v380 = vmul.f32 %v377, %v379
      %v381 = vadd.f32 %v377, %v380
      %vm382 = vweird.f32 %v373
      %vm383 = vweird.f32 %v377
      %vm384 = vmor %vm382, %vm383
      %v385 = vsel %vm384, %v377, %v381
      %v386 = vand.u32 2147483647, %v373
      %vm387 = vcmp.eq.f32.partialorder %v386, 8.507059e+37
      %v388 = vand.u32 %v373, 2147483648
      %v389 = vor.u32 1.1754944e-38, %v388
      %v390 = vsel %vm387, %v389, %v385
      %v391 = vmul.f32 %v368, %v390
      %v392 = vrcp.pop %v376
      %v393 = vmul.f32 %v376, %v392
      %v394 = vsub.f32 1.0, %v393
      %v395 = vmul.f32 %v392, %v394
      %v396 = vadd.f32 %v392, %v395
      %vm397 = vweird.f32 %v376
      %vm398 = vweird.f32 %v392
      %vm399 = vmor %vm397, %vm398
      %v400 = vsel %vm399, %v392, %v396
      %v401 = vand.u32 2147483647, %v376
      %vm402 = vcmp.eq.f32.partialorder %v401, 8.507059e+37
      %v403 = vand.u32 %v376, 2147483648
      %v404 = vor.u32 1.1754944e-38, %v403
      %v405 = vsel %vm402, %v404, %v400
      %v406 = vmul.f32 %v370, %v405
      %v407 = vpack.c.bf16 %v406, %v391
      %408 = vrot.lane.b32.xlu0 %v333, 64
      %v409 = vpop.permute.xlu0 %408
      %v412 = vsel %vm358, %v407, 0
      %414 = vmatpush.bf16.msra.mxu0 0
      %415 = vmatpush.bf16.msra.mxu0 0
      %416 = vmatpush.bf16.msra.mxu0 0
      %417 = vmatpush.bf16.msra.mxu0 0
      %418 = vmatpush.bf16.msra.mxu0 0
      %419 = vmatpush.bf16.msra.mxu0 0
      %420 = vmatpush.bf16.msra.mxu0 0
      %421 = vmatpush.bf16.msra.mxu0 %v409
      %422 = vmatmul.bf16.gmra.mxu0 %v412
      %v423 = vpop.f32.mrf.mxu0
      %v424 = vadd.f32 0.0, %v423
      %v425 = vpop.f32.mrf.mxu0
      %v426 = vadd.f32 0.0, %v425
      %427 = vdwg.mxu0
      %v428 = vpack.c.bf16 %v424, %v424
      %v429 = vpack.c.bf16 %v426, %v426
      %vm430 = vcmask 60416
      %431 = vst.msk [vmem:[%s224] sm:$0xf] %vm430, %v428
      %432 = vst.msk [vmem:[%s224 + $0x4] sm:$0xf] %vm430, %v429
      %434 = vrot.lane.b32.xlu0 %v332, 120
      %v435 = vpop.permute.xlu0 %434
      %436 = vrot.lane.b32.xlu0 %v333, 88
      %v437 = vpop.permute.xlu0 %436
      %v439 = vsel %vm337, %v435, 0
      %v442 = vsel %vm337, %v437, 0
      %444 = vmatpush.bf16.xpose.msra.mxu0 0
      %445 = vmatpush.bf16.xpose.msra.mxu0 0
      %446 = vmatpush.bf16.xpose.msra.mxu0 0
      %447 = vmatpush.bf16.xpose.msra.mxu0 0
      %448 = vmatpush.bf16.xpose.msra.mxu0 0
      %449 = vmatpush.bf16.xpose.msra.mxu0 0
      %450 = vmatpush.bf16.xpose.msra.mxu0 0
      %451 = vmatpush.bf16.xpose.msra.mxu0 %v442
      %452 = vmatmul.bf16.gmra.mxu0 %v439
      %v453 = vpop.f32.mrf.mxu0
      %v454 = vadd.f32 0.0, %v453
      %v455 = vpop.f32.mrf.mxu0
      %v456 = vadd.f32 0.0, %v455
      %457 = vdwg.mxu0
      %v458 = vsel %vm358, %v454, -inf
      %459 = vmax.xlane.f32.xlu0 %v458
      %v460 = vpop.xlane.xlu0 %459
      %v461 = vsel %vm358, %v456, -inf
      %462 = vmax.xlane.f32.xlu0 %v461
      %v463 = vpop.xlane.xlu0 %462
      %v464 = vsub.f32 %v454, %v460
      %v465 = vsub.f32 %v456, %v463
      %v466 = vmul.f32 %v464, 1.442695
      %v467 = vpow.pop %v466
      %v468 = vmul.f32 %v465, 1.442695
      %v469 = vpow.pop %v468
      %v470 = vsel %vm358, %v467, 0.0
      %471 = vadd.xlane.f32.xlu0 %v470
      %v472 = vpop.xlane.xlu0 %471
      %v473 = vsel %vm358, %v469, 0.0
      %474 = vadd.xlane.f32.xlu0 %v473
      %v475 = vpop.xlane.xlu0 %474
      %v476 = vrcp.pop %v472
      %v477 = vmul.f32 %v472, %v476
      %v478 = vsub.f32 1.0, %v477
      %v479 = vmul.f32 %v476, %v478
      %v480 = vadd.f32 %v476, %v479
      %vm481 = vweird.f32 %v472
      %vm482 = vweird.f32 %v476
      %vm483 = vmor %vm481, %vm482
      %v484 = vsel %vm483, %v476, %v480
      %v485 = vand.u32 2147483647, %v472
      %vm486 = vcmp.eq.f32.partialorder %v485, 8.507059e+37
      %v487 = vand.u32 %v472, 2147483648
      %v488 = vor.u32 1.1754944e-38, %v487
      %v489 = vsel %vm486, %v488, %v484
      %v490 = vmul.f32 %v467, %v489
      %v491 = vrcp.pop %v475
      %v492 = vmul.f32 %v475, %v491
      %v493 = vsub.f32 1.0, %v492
      %v494 = vmul.f32 %v491, %v493
      %v495 = vadd.f32 %v491, %v494
      %vm496 = vweird.f32 %v475
      %vm497 = vweird.f32 %v491
      %vm498 = vmor %vm496, %vm497
      %v499 = vsel %vm498, %v491, %v495
      %v500 = vand.u32 2147483647, %v475
      %vm501 = vcmp.eq.f32.partialorder %v500, 8.507059e+37
      %v502 = vand.u32 %v475, 2147483648
      %v503 = vor.u32 1.1754944e-38, %v502
      %v504 = vsel %vm501, %v503, %v499
      %v505 = vmul.f32 %v469, %v504
      %v506 = vpack.c.bf16 %v505, %v490
      %507 = vrot.lane.b32.xlu0 %v333, 56
      %v508 = vpop.permute.xlu0 %507
      %v511 = vsel %vm358, %v506, 0
      %513 = vmatpush.bf16.msra.mxu0 0
      %514 = vmatpush.bf16.msra.mxu0 0
      %515 = vmatpush.bf16.msra.mxu0 0
      %516 = vmatpush.bf16.msra.mxu0 0
      %517 = vmatpush.bf16.msra.mxu0 0
      %518 = vmatpush.bf16.msra.mxu0 0
      %519 = vmatpush.bf16.msra.mxu0 0
      %520 = vmatpush.bf16.msra.mxu0 %v508
      %521 = vmatmul.bf16.gmra.mxu0 %v511
      %v522 = vpop.f32.mrf.mxu0
      %v523 = vadd.f32 0.0, %v522
      %v524 = vpop.f32.mrf.mxu0
      %v525 = vadd.f32 0.0, %v524
      %526 = vdwg.mxu0
      %v527 = vpack.c.bf16 %v523, %v523
      %v528 = vpack.c.bf16 %v525, %v525
      %531 = vrot.lane.b32.xlu0 %v527, 8
      %v532 = vpop.permute.xlu0 %531
      %533 = vrot.lane.b32.xlu0 %v528, 8
      %v534 = vpop.permute.xlu0 %533
      %vm537 = vcmask 126016
      %538 = vst.msk [vmem:[%s224] sm:$0xf] %vm537, %v532
      %539 = vst.msk [vmem:[%s224 + $0x4] sm:$0xf] %vm537, %v534
      %540 = vrot.lane.b32.xlu0 %v332, 112
      %v541 = vpop.permute.xlu0 %540
      %542 = vrot.lane.b32.xlu0 %v333, 80
      %v543 = vpop.permute.xlu0 %542
      %v545 = vsel %vm337, %v541, 0
      %v548 = vsel %vm337, %v543, 0
      %550 = vmatpush.bf16.xpose.msra.mxu0 0
      %551 = vmatpush.bf16.xpose.msra.mxu0 0
      %552 = vmatpush.bf16.xpose.msra.mxu0 0
      %553 = vmatpush.bf16.xpose.msra.mxu0 0
      %554 = vmatpush.bf16.xpose.msra.mxu0 0
      %555 = vmatpush.bf16.xpose.msra.mxu0 0
      %556 = vmatpush.bf16.xpose.msra.mxu0 0
      %557 = vmatpush.bf16.xpose.msra.mxu0 %v548
      %558 = vmatmul.bf16.gmra.mxu0 %v545
      %v559 = vpop.f32.mrf.mxu0
      %v560 = vadd.f32 0.0, %v559
      %v561 = vpop.f32.mrf.mxu0
      %v562 = vadd.f32 0.0, %v561
      %563 = vdwg.mxu0
      %v564 = vsel %vm358, %v560, -inf
      %565 = vmax.xlane.f32.xlu0 %v564
      %v566 = vpop.xlane.xlu0 %565
      %v567 = vsel %vm358, %v562, -inf
      %568 = vmax.xlane.f32.xlu0 %v567
      %v569 = vpop.xlane.xlu0 %568
      %v570 = vsub.f32 %v560, %v566
      %v571 = vsub.f32 %v562, %v569
      %v572 = vmul.f32 %v570, 1.442695
      %v573 = vpow.pop %v572
      %v574 = vmul.f32 %v571, 1.442695
      %v575 = vpow.pop %v574
      %v576 = vsel %vm358, %v573, 0.0
      %577 = vadd.xlane.f32.xlu0 %v576
      %v578 = vpop.xlane.xlu0 %577
      %v579 = vsel %vm358, %v575, 0.0
      %580 = vadd.xlane.f32.xlu0 %v579
      %v581 = vpop.xlane.xlu0 %580
      %v582 = vrcp.pop %v578
      %v583 = vmul.f32 %v578, %v582
      %v584 = vsub.f32 1.0, %v583
      %v585 = vmul.f32 %v582, %v584
      %v586 = vadd.f32 %v582, %v585
      %vm587 = vweird.f32 %v578
      %vm588 = vweird.f32 %v582
      %vm589 = vmor %vm587, %vm588
      %v590 = vsel %vm589, %v582, %v586
      %v591 = vand.u32 2147483647, %v578
      %vm592 = vcmp.eq.f32.partialorder %v591, 8.507059e+37
      %v593 = vand.u32 %v578, 2147483648
      %v594 = vor.u32 1.1754944e-38, %v593
      %v595 = vsel %vm592, %v594, %v590
      %v596 = vmul.f32 %v573, %v595
      %v597 = vrcp.pop %v581
      %v598 = vmul.f32 %v581, %v597
      %v599 = vsub.f32 1.0, %v598
      %v600 = vmul.f32 %v597, %v599
      %v601 = vadd.f32 %v597, %v600
      %vm602 = vweird.f32 %v581
      %vm603 = vweird.f32 %v597
      %vm604 = vmor %vm602, %vm603
      %v605 = vsel %vm604, %v597, %v601
      %v606 = vand.u32 2147483647, %v581
      %vm607 = vcmp.eq.f32.partialorder %v606, 8.507059e+37
      %v608 = vand.u32 %v581, 2147483648
      %v609 = vor.u32 1.1754944e-38, %v608
      %v610 = vsel %vm607, %v609, %v605
      %v611 = vmul.f32 %v575, %v610
      %v612 = vpack.c.bf16 %v611, %v596
      %613 = vrot.lane.b32.xlu0 %v333, 48
      %v614 = vpop.permute.xlu0 %613
      %v617 = vsel %vm358, %v612, 0
      %619 = vmatpush.bf16.msra.mxu0 0
      %620 = vmatpush.bf16.msra.mxu0 0
      %621 = vmatpush.bf16.msra.mxu0 0
      %622 = vmatpush.bf16.msra.mxu0 0
      %623 = vmatpush.bf16.msra.mxu0 0
      %624 = vmatpush.bf16.msra.mxu0 0
      %625 = vmatpush.bf16.msra.mxu0 0
      %626 = vmatpush.bf16.msra.mxu0 %v614
      %627 = vmatmul.bf16.gmra.mxu0 %v617
      %v628 = vpop.f32.mrf.mxu0
      %v629 = vadd.f32 0.0, %v628
      %v630 = vpop.f32.mrf.mxu0
      %v631 = vadd.f32 0.0, %v630
      %632 = vdwg.mxu0
      %v633 = vpack.c.bf16 %v629, %v629
      %v634 = vpack.c.bf16 %v631, %v631
      %637 = vrot.lane.b32.xlu0 %v633, 16
      %v638 = vpop.permute.xlu0 %637
      %639 = vrot.lane.b32.xlu0 %v634, 16
      %v640 = vpop.permute.xlu0 %639
      %vm643 = vcmask 191616
      %644 = vst.msk [vmem:[%s224] sm:$0xf] %vm643, %v638
      %645 = vst.msk [vmem:[%s224 + $0x4] sm:$0xf] %vm643, %v640
      %646 = vrot.lane.b32.xlu0 %v332, 104
      %v647 = vpop.permute.xlu0 %646
      %648 = vrot.lane.b32.xlu0 %v333, 72
      %v649 = vpop.permute.xlu0 %648
      %v651 = vsel %vm337, %v647, 0
      %v654 = vsel %vm337, %v649, 0
      %656 = vmatpush.bf16.xpose.msra.mxu0 0
      %657 = vmatpush.bf16.xpose.msra.mxu0 0
      %658 = vmatpush.bf16.xpose.msra.mxu0 0
      %659 = vmatpush.bf16.xpose.msra.mxu0 0
      %660 = vmatpush.bf16.xpose.msra.mxu0 0
      %661 = vmatpush.bf16.xpose.msra.mxu0 0
      %662 = vmatpush.bf16.xpose.msra.mxu0 0
      %663 = vmatpush.bf16.xpose.msra.mxu0 %v654
      %664 = vmatmul.bf16.gmra.mxu0 %v651
      %v665 = vpop.f32.mrf.mxu0
      %v666 = vadd.f32 0.0, %v665
      %v667 = vpop.f32.mrf.mxu0
      %v668 = vadd.f32 0.0, %v667
      %669 = vdwg.mxu0
      %v670 = vsel %vm358, %v666, -inf
      %671 = vmax.xlane.f32.xlu0 %v670
      %v672 = vpop.xlane.xlu0 %671
      %v673 = vsel %vm358, %v668, -inf
      %674 = vmax.xlane.f32.xlu0 %v673
      %v675 = vpop.xlane.xlu0 %674
      %v676 = vsub.f32 %v666, %v672
      %v677 = vsub.f32 %v668, %v675
      %v678 = vmul.f32 %v676, 1.442695
      %v679 = vpow.pop %v678
      %v680 = vmul.f32 %v677, 1.442695
      %v681 = vpow.pop %v680
      %v682 = vsel %vm358, %v679, 0.0
      %683 = vadd.xlane.f32.xlu0 %v682
      %v684 = vpop.xlane.xlu0 %683
      %v685 = vsel %vm358, %v681, 0.0
      %686 = vadd.xlane.f32.xlu0 %v685
      %v687 = vpop.xlane.xlu0 %686
      %v688 = vrcp.pop %v684
      %v689 = vmul.f32 %v684, %v688
      %v690 = vsub.f32 1.0, %v689
      %v691 = vmul.f32 %v688, %v690
      %v692 = vadd.f32 %v688, %v691
      %vm693 = vweird.f32 %v684
      %vm694 = vweird.f32 %v688
      %vm695 = vmor %vm693, %vm694
      %v696 = vsel %vm695, %v688, %v692
      %v697 = vand.u32 2147483647, %v684
      %vm698 = vcmp.eq.f32.partialorder %v697, 8.507059e+37
      %v699 = vand.u32 %v684, 2147483648
      %v700 = vor.u32 1.1754944e-38, %v699
      %v701 = vsel %vm698, %v700, %v696
      %v702 = vmul.f32 %v679, %v701
      %v703 = vrcp.pop %v687
      %v704 = vmul.f32 %v687, %v703
      %v705 = vsub.f32 1.0, %v704
      %v706 = vmul.f32 %v703, %v705
      %v707 = vadd.f32 %v703, %v706
      %vm708 = vweird.f32 %v687
      %vm709 = vweird.f32 %v703
      %vm710 = vmor %vm708, %vm709
      %v711 = vsel %vm710, %v703, %v707
      %v712 = vand.u32 2147483647, %v687
      %vm713 = vcmp.eq.f32.partialorder %v712, 8.507059e+37
      %v714 = vand.u32 %v687, 2147483648
      %v715 = vor.u32 1.1754944e-38, %v714
      %v716 = vsel %vm713, %v715, %v711
      %v717 = vmul.f32 %v681, %v716
      %v718 = vpack.c.bf16 %v717, %v702
      %719 = vrot.lane.b32.xlu0 %v333, 40
      %v720 = vpop.permute.xlu0 %719
      %v723 = vsel %vm358, %v718, 0
      %725 = vmatpush.bf16.msra.mxu0 0
      %726 = vmatpush.bf16.msra.mxu0 0
      %727 = vmatpush.bf16.msra.mxu0 0
      %728 = vmatpush.bf16.msra.mxu0 0
      %729 = vmatpush.bf16.msra.mxu0 0
      %730 = vmatpush.bf16.msra.mxu0 0
      %731 = vmatpush.bf16.msra.mxu0 0
      %732 = vmatpush.bf16.msra.mxu0 %v720
      %733 = vmatmul.bf16.gmra.mxu0 %v723
      %v734 = vpop.f32.mrf.mxu0
      %v735 = vadd.f32 0.0, %v734
      %v736 = vpop.f32.mrf.mxu0
      %v737 = vadd.f32 0.0, %v736
      %738 = vdwg.mxu0
      %v739 = vpack.c.bf16 %v735, %v735
      %v740 = vpack.c.bf16 %v737, %v737
      %743 = vrot.lane.b32.xlu0 %v739, 24
      %v744 = vpop.permute.xlu0 %743
      %745 = vrot.lane.b32.xlu0 %v740, 24
      %v746 = vpop.permute.xlu0 %745
      %vm749 = vcmask 257216
      %750 = vst.msk [vmem:[%s224] sm:$0xf] %vm749, %v744
      %751 = vst.msk [vmem:[%s224 + $0x4] sm:$0xf] %vm749, %v746
      %p752 = scmp.lt.s32.totalorder %s16, 1
      %s753 = scalar_select %p752, %s16, 1
      %s754 = smul.addr %s753, 2
      %s755 = smul.addr %s754, 4
      %s756 = scalar_lea.vmem %s5, %s755
      // Predicated region
      $region41: #{cnn_attention_forward.9} parent=39 // pred_check
        %p757 = pneg %p144
      $region42: #{cnn_attention_forward.9} parent=39 // pred_check_branch
        %759 = sbr.rel (%p757) target = $region44
      $region43: #{cnn_attention_forward.9} parent=39 // pred_region
        _
      $region44: #{cnn_attention_forward.9} parent=39 // pred_fallthru
        _
    $region40: #{cnn_attention_forward.9} parent=5 // pred_fallthru
      _
    %p760 = scmp.le.s32.totalorder 2, %s11
    // Predicated region
    $region45: #{cnn_attention_forward.9} parent=5 // pred_check
      %p761 = pneg %p760
    $region46: #{cnn_attention_forward.9} parent=5 // pred_check_branch
      %763 = sbr.rel (%p761) target = $region48
    $region47: #{cnn_attention_forward.9} parent=5 // pred_region
      %s764 = ssub.s32 %s11, 2
      // Predicated region
      $region49: #{cnn_attention_forward.9} parent=47 // pred_check
        %p765 = pneg %p150
      $region50: #{cnn_attention_forward.9} parent=47 // pred_check_branch
        %767 = sbr.rel (%p765) target = $region52
      $region51: #{cnn_attention_forward.9} parent=47 // pred_region
        %p768 = scmp.lt.s32.totalorder %s17, 1
        %s769 = scalar_select %p768, %s17, 1
        %s770 = smul.addr %s769, 2
        %s771 = smul.addr %s770, 4
        %s772 = scalar_lea.vmem %s5, %s771
      $region52: #{cnn_attention_forward.9} parent=47 // pred_fallthru
        _
    $region48: #{cnn_attention_forward.9} parent=5 // pred_fallthru
      _
  $region6: #{cnn_attention_forward.9} parent=0 // loop_footer
    %s15 = sadd.s32 1, %s11
  $region7: #{cnn_attention_forward.9} parent=0 // loop_footer_branch
    %10 = sbr.rel target = $region3
  $region8: #{cnn_attention_forward.9} parent=0 // loop_exit
    _

// kernel: cnn_attention_forward.10
$region0: #{cnn_attention_forward.10}
  #allocation0 [shape = 'u32[]', space=smem, size = 0x4, offset = 0x4, fixed_abs, tag = 'smem constant byte address 0x4 - core index']
  #allocation1 [shape = 'u32[72,128]{1,0:T(1,128)}', space=vmem, size = 0x9000, scoped, tag = 'internal scratch']
  %s0 = inlined_call_operand.vmem [shape: bf16[32,32], index: 0, kind: input, shape index: {}]
  %s1 = inlined_call_operand.vmem [shape: f32[32,32], index: 1, kind: input, shape index: {}]
  %s2 = inlined_call_operand.vmem [shape: bf16[32,32], index: 2, kind: input, shape index: {}]
  %s3 = inlined_call_operand.vmem [shape: f32[1,32], index: 3, kind: input, shape index: {}]
  %s4 = inlined_call_operand.vmem [shape: f32[1,32], index: 4, kind: input, shape index: {}]
  %s5 = inlined_call_operand.vmem [shape: f32[1,32], index: 5, kind: input, shape index: {}]
  %s6 = inlined_call_operand.vmem [shape: bf16[32,128], index: 6, kind: input, shape index: {}]
  %s7 = inlined_call_operand.vmem [shape: f32[1,128], index: 7, kind: input, shape index: {}]
  %s8 = inlined_call_operand.vmem [shape: bf16[128,32], index: 8, kind: input, shape index: {}]
  %s9 = inlined_call_operand.vmem [shape: f32[1,32], index: 9, kind: input, shape index: {}]
  %s10 = inlined_call_operand.vmem [shape: f32[32,32], index: 10, kind: output, shape index: {}]
  %s11 = sld [smem:[#allocation0]]
  $region73: #{cnn_attention_forward.10} parent=0
    _
  %s13 = ssub.s32 1, %s11
  %s14 = scalar_select 0, %s13, %s11
  loop: start=0, step=1, limit=4
  $region2: #{cnn_attention_forward.10} parent=0 // loop_pre_header
    _
  $region3: #{cnn_attention_forward.10} parent=0 // loop_header
    %s16 = sphi 0, %s20
    %p17 = scmp.ge.s32.totalorder %s16, 4
    %s26 = sphi 0, %s28
    %s29 = sphi 0, %s26
    %s30 = sphi 0, %s29
    %s46 = sphi 0, %s30
    %s52 = sphi 0, %s54
    %s55 = sphi 0, %s52
    %s56 = sphi 0, %s55
    %s72 = sphi 0, %s56
    %s76 = sphi 0, %s76
    %s78 = sphi 0, %s76
    %s79 = sphi 0, %s78
    %s93 = sphi 0, %s79
    %s97 = sphi 0, %s97
    %s99 = sphi 0, %s97
    %s100 = sphi 0, %s99
    %s114 = sphi 0, %s100
    %s118 = sphi 0, %s118
    %s120 = sphi 0, %s118
    %s121 = sphi 0, %s120
    %s135 = sphi 0, %s121
    %s139 = sphi 0, %s139
    %s141 = sphi 0, %s139
    %s142 = sphi 0, %s141
    %s156 = sphi 0, %s142
    %s160 = sphi 0, %s160
    %s162 = sphi 0, %s160
    %s163 = sphi 0, %s162
    %s177 = sphi 0, %s163
    %s181 = sphi 0, %s181
    %s183 = sphi 0, %s181
    %s184 = sphi 0, %s183
    %s198 = sphi 0, %s184
    %s202 = sphi 0, %s202
    %s204 = sphi 0, %s202
    %s205 = sphi 0, %s204
    %s219 = sphi 0, %s205
    %s223 = sphi 0, %s223
    %s225 = sphi 0, %s223
    %s226 = sphi 0, %s225
    %s240 = sphi 0, %s226
    %s246 = sphi 0, %s248
    %s249 = sphi 0, %s246
    %s250 = sphi 0, %s249
    %s266 = sphi 0, %s250
  $region4: #{cnn_attention_forward.10} parent=0 // loop_header_branch
    %19 = sbr.rel (%p17) target = $region8
  $region5: #{cnn_attention_forward.10} parent=0 // loop_body
    %s21 = ssub.s32 %s16, 1
    %s22 = ssub.s32 %s16, 2
    %s23 = sadd.s32 %s16, 1
    %s24 = ssub.s32 %s16, %s23
    %p25 = scmp.eq.s32.totalorder %s24, 0
    %s27 = sadd.s32 %s26, 1
    %s28 = scalar_select %p25, %s26, %s27
    %p31 = pneg %p25
    %p32 = scmp.eq.s32.totalorder %s16, 1
    %p33 = por %p31, %p32
    %p34 = scmp.ne.s32.totalorder %s26, %s29
    %p35 = scmp.eq.s32.totalorder %s16, 0
    %p36 = por %p34, %p35
    %p37 = scmp.ne.s32.totalorder %s26, %s29
    %p38 = scmp.eq.s32.totalorder %s21, 1
    %p39 = por %p37, %p38
    %p40 = scmp.ne.s32.totalorder %s29, %s30
    %p41 = scmp.eq.s32.totalorder %s21, 0
    %p42 = por %p40, %p41
    %p43 = scmp.ne.s32.totalorder %s29, %s30
    %p44 = scmp.eq.s32.totalorder %s22, 1
    %p45 = por %p43, %p44
    %p47 = scmp.ne.s32.totalorder %s30, %s46
    %p48 = scmp.eq.s32.totalorder %s22, 0
    %p49 = por %p47, %p48
    %s50 = ssub.s32 %s16, %s23
    %p51 = scmp.eq.s32.totalorder %s50, 0
    %s53 = sadd.s32 %s52, 1
    %s54 = scalar_select %p51, %s52, %s53
    %p57 = pneg %p51
    %p58 = scmp.eq.s32.totalorder %s16, 1
    %p59 = por %p57, %p58
    %p60 = scmp.ne.s32.totalorder %s52, %s55
    %p61 = scmp.eq.s32.totalorder %s16, 0
    %p62 = por %p60, %p61
    %p63 = scmp.ne.s32.totalorder %s52, %s55
    %p64 = scmp.eq.s32.totalorder %s21, 1
    %p65 = por %p63, %p64
    %p66 = scmp.ne.s32.totalorder %s55, %s56
    %p67 = scmp.eq.s32.totalorder %s21, 0
    %p68 = por %p66, %p67
    %p69 = scmp.ne.s32.totalorder %s55, %s56
    %p70 = scmp.eq.s32.totalorder %s22, 1
    %p71 = por %p69, %p70
    %p73 = scmp.ne.s32.totalorder %s56, %s72
    %p74 = scmp.eq.s32.totalorder %s22, 0
    %p75 = por %p73, %p74
    %s77 = sadd.s32 %s76, 1
    %p80 = scmp.eq.s32.totalorder %s16, 1
    %p81 = scmp.ne.s32.totalorder %s76, %s78
    %p82 = scmp.eq.s32.totalorder %s16, 0
    %p83 = por %p81, %p82
    %p84 = scmp.ne.s32.totalorder %s76, %s78
    %p85 = scmp.eq.s32.totalorder %s21, 1
    %p86 = por %p84, %p85
    %p87 = scmp.ne.s32.totalorder %s78, %s79
    %p88 = scmp.eq.s32.totalorder %s21, 0
    %p89 = por %p87, %p88
    %p90 = scmp.ne.s32.totalorder %s78, %s79
    %p91 = scmp.eq.s32.totalorder %s22, 1
    %p92 = por %p90, %p91
    %p94 = scmp.ne.s32.totalorder %s79, %s93
    %p95 = scmp.eq.s32.totalorder %s22, 0
    %p96 = por %p94, %p95
    %s98 = sadd.s32 %s97, 1
    %p101 = scmp.eq.s32.totalorder %s16, 1
    %p102 = scmp.ne.s32.totalorder %s97, %s99
    %p103 = scmp.eq.s32.totalorder %s16, 0
    %p104 = por %p102, %p103
    %p105 = scmp.ne.s32.totalorder %s97, %s99
    %p106 = scmp.eq.s32.totalorder %s21, 1
    %p107 = por %p105, %p106
    %p108 = scmp.ne.s32.totalorder %s99, %s100
    %p109 = scmp.eq.s32.totalorder %s21, 0
    %p110 = por %p108, %p109
    %p111 = scmp.ne.s32.totalorder %s99, %s100
    %p112 = scmp.eq.s32.totalorder %s22, 1
    %p113 = por %p111, %p112
    %p115 = scmp.ne.s32.totalorder %s100, %s114
    %p116 = scmp.eq.s32.totalorder %s22, 0
    %p117 = por %p115, %p116
    %s119 = sadd.s32 %s118, 1
    %p122 = scmp.eq.s32.totalorder %s16, 1
    %p123 = scmp.ne.s32.totalorder %s118, %s120
    %p124 = scmp.eq.s32.totalorder %s16, 0
    %p125 = por %p123, %p124
    %p126 = scmp.ne.s32.totalorder %s118, %s120
    %p127 = scmp.eq.s32.totalorder %s21, 1
    %p128 = por %p126, %p127
    %p129 = scmp.ne.s32.totalorder %s120, %s121
    %p130 = scmp.eq.s32.totalorder %s21, 0
    %p131 = por %p129, %p130
    %p132 = scmp.ne.s32.totalorder %s120, %s121
    %p133 = scmp.eq.s32.totalorder %s22, 1
    %p134 = por %p132, %p133
    %p136 = scmp.ne.s32.totalorder %s121, %s135
    %p137 = scmp.eq.s32.totalorder %s22, 0
    %p138 = por %p136, %p137
    %s140 = sadd.s32 %s139, 1
    %p143 = scmp.eq.s32.totalorder %s16, 1
    %p144 = scmp.ne.s32.totalorder %s139, %s141
    %p145 = scmp.eq.s32.totalorder %s16, 0
    %p146 = por %p144, %p145
    %p147 = scmp.ne.s32.totalorder %s139, %s141
    %p148 = scmp.eq.s32.totalorder %s21, 1
    %p149 = por %p147, %p148
    %p150 = scmp.ne.s32.totalorder %s141, %s142
    %p151 = scmp.eq.s32.totalorder %s21, 0
    %p152 = por %p150, %p151
    %p153 = scmp.ne.s32.totalorder %s141, %s142
    %p154 = scmp.eq.s32.totalorder %s22, 1
    %p155 = por %p153, %p154
    %p157 = scmp.ne.s32.totalorder %s142, %s156
    %p158 = scmp.eq.s32.totalorder %s22, 0
    %p159 = por %p157, %p158
    %s161 = sadd.s32 %s160, 1
    %p164 = scmp.eq.s32.totalorder %s16, 1
    %p165 = scmp.ne.s32.totalorder %s160, %s162
    %p166 = scmp.eq.s32.totalorder %s16, 0
    %p167 = por %p165, %p166
    %p168 = scmp.ne.s32.totalorder %s160, %s162
    %p169 = scmp.eq.s32.totalorder %s21, 1
    %p170 = por %p168, %p169
    %p171 = scmp.ne.s32.totalorder %s162, %s163
    %p172 = scmp.eq.s32.totalorder %s21, 0
    %p173 = por %p171, %p172
    %p174 = scmp.ne.s32.totalorder %s162, %s163
    %p175 = scmp.eq.s32.totalorder %s22, 1
    %p176 = por %p174, %p175
    %p178 = scmp.ne.s32.totalorder %s163, %s177
    %p179 = scmp.eq.s32.totalorder %s22, 0
    %p180 = por %p178, %p179
    %s182 = sadd.s32 %s181, 1
    %p185 = scmp.eq.s32.totalorder %s16, 1
    %p186 = scmp.ne.s32.totalorder %s181, %s183
    %p187 = scmp.eq.s32.totalorder %s16, 0
    %p188 = por %p186, %p187
    %p189 = scmp.ne.s32.totalorder %s181, %s183
    %p190 = scmp.eq.s32.totalorder %s21, 1
    %p191 = por %p189, %p190
    %p192 = scmp.ne.s32.totalorder %s183, %s184
    %p193 = scmp.eq.s32.totalorder %s21, 0
    %p194 = por %p192, %p193
    %p195 = scmp.ne.s32.totalorder %s183, %s184
    %p196 = scmp.eq.s32.totalorder %s22, 1
    %p197 = por %p195, %p196
    %p199 = scmp.ne.s32.totalorder %s184, %s198
    %p200 = scmp.eq.s32.totalorder %s22, 0
    %p201 = por %p199, %p200
    %s203 = sadd.s32 %s202, 1
    %p206 = scmp.eq.s32.totalorder %s16, 1
    %p207 = scmp.ne.s32.totalorder %s202, %s204
    %p208 = scmp.eq.s32.totalorder %s16, 0
    %p209 = por %p207, %p208
    %p210 = scmp.ne.s32.totalorder %s202, %s204
    %p211 = scmp.eq.s32.totalorder %s21, 1
    %p212 = por %p210, %p211
    %p213 = scmp.ne.s32.totalorder %s204, %s205
    %p214 = scmp.eq.s32.totalorder %s21, 0
    %p215 = por %p213, %p214
    %p216 = scmp.ne.s32.totalorder %s204, %s205
    %p217 = scmp.eq.s32.totalorder %s22, 1
    %p218 = por %p216, %p217
    %p220 = scmp.ne.s32.totalorder %s205, %s219
    %p221 = scmp.eq.s32.totalorder %s22, 0
    %p222 = por %p220, %p221
    %s224 = sadd.s32 %s223, 1
    %p227 = scmp.eq.s32.totalorder %s16, 1
    %p228 = scmp.ne.s32.totalorder %s223, %s225
    %p229 = scmp.eq.s32.totalorder %s16, 0
    %p230 = por %p228, %p229
    %p231 = scmp.ne.s32.totalorder %s223, %s225
    %p232 = scmp.eq.s32.totalorder %s21, 1
    %p233 = por %p231, %p232
    %p234 = scmp.ne.s32.totalorder %s225, %s226
    %p235 = scmp.eq.s32.totalorder %s21, 0
    %p236 = por %p234, %p235
    %p237 = scmp.ne.s32.totalorder %s225, %s226
    %p238 = scmp.eq.s32.totalorder %s22, 1
    %p239 = por %p237, %p238
    %p241 = scmp.ne.s32.totalorder %s226, %s240
    %p242 = scmp.eq.s32.totalorder %s22, 0
    %p243 = por %p241, %p242
    %s244 = ssub.s32 %s16, %s23
    %p245 = scmp.eq.s32.totalorder %s244, 0
    %s247 = sadd.s32 %s246, 1
    %s248 = scalar_select %p245, %s246, %s247
    %p251 = pneg %p245
    %p252 = scmp.eq.s32.totalorder %s16, 1
    %p253 = por %p251, %p252
    %p254 = scmp.ne.s32.totalorder %s246, %s249
    %p255 = scmp.eq.s32.totalorder %s16, 0
    %p256 = por %p254, %p255
    %p257 = scmp.ne.s32.totalorder %s246, %s249
    %p258 = scmp.eq.s32.totalorder %s21, 1
    %p259 = por %p257, %p258
    %p260 = scmp.ne.s32.totalorder %s249, %s250
    %p261 = scmp.eq.s32.totalorder %s21, 0
    %p262 = por %p260, %p261
    %p263 = scmp.ne.s32.totalorder %s249, %s250
    %p264 = scmp.eq.s32.totalorder %s22, 1
    %p265 = por %p263, %p264
    %p267 = scmp.ne.s32.totalorder %s250, %s266
    %p268 = scmp.eq.s32.totalorder %s22, 0
    %p269 = por %p267, %p268
    %p270 = scmp.le.s32.totalorder 1, %s16
    %p271 = scmp.lt.s32.totalorder %s16, 3
    %p272 = pnand %p270, %p271
    %p273 = pneg %p272
    // Predicated region
    $region9: #{cnn_attention_forward.10} parent=5 // pred_check
      _
    $region10: #{cnn_attention_forward.10} parent=5 // pred_check_branch
      %275 = sbr.rel (%p272) target = $region12
    $region11: #{cnn_attention_forward.10} parent=5 // pred_region
      %s276 = ssub.s32 %s16, 1
      // Predicated region
      $region13: #{cnn_attention_forward.10} parent=11 // pred_check
        %p277 = pneg %p89
      $region14: #{cnn_attention_forward.10} parent=11 // pred_check_branch
        %279 = sbr.rel (%p277) target = $region16
      $region15: #{cnn_attention_forward.10} parent=11 // pred_region
        _
      $region16: #{cnn_attention_forward.10} parent=11 // pred_fallthru
        _
      // Predicated region
      $region17: #{cnn_attention_forward.10} parent=11 // pred_check
        %p280 = pneg %p110
      $region18: #{cnn_attention_forward.10} parent=11 // pred_check_branch
        %282 = sbr.rel (%p280) target = $region20
      $region19: #{cnn_attention_forward.10} parent=11 // pred_region
        _
      $region20: #{cnn_attention_forward.10} parent=11 // pred_fallthru
        _
      // Predicated region
      $region21: #{cnn_attention_forward.10} parent=11 // pred_check
        %p283 = pneg %p131
      $region22: #{cnn_attention_forward.10} parent=11 // pred_check_branch
        %285 = sbr.rel (%p283) target = $region24
      $region23: #{cnn_attention_forward.10} parent=11 // pred_region
        _
      $region24: #{cnn_attention_forward.10} parent=11 // pred_fallthru
        _
      // Predicated region
      $region25: #{cnn_attention_forward.10} parent=11 // pred_check
        %p286 = pneg %p152
      $region26: #{cnn_attention_forward.10} parent=11 // pred_check_branch
        %288 = sbr.rel (%p286) target = $region28
      $region27: #{cnn_attention_forward.10} parent=11 // pred_region
        _
      $region28: #{cnn_attention_forward.10} parent=11 // pred_fallthru
        _
      // Predicated region
      $region29: #{cnn_attention_forward.10} parent=11 // pred_check
        %p289 = pneg %p173
      $region30: #{cnn_attention_forward.10} parent=11 // pred_check_branch
        %291 = sbr.rel (%p289) target = $region32
      $region31: #{cnn_attention_forward.10} parent=11 // pred_region
        _
      $region32: #{cnn_attention_forward.10} parent=11 // pred_fallthru
        _
      // Predicated region
      $region33: #{cnn_attention_forward.10} parent=11 // pred_check
        %p292 = pneg %p194
      $region34: #{cnn_attention_forward.10} parent=11 // pred_check_branch
        %294 = sbr.rel (%p292) target = $region36
      $region35: #{cnn_attention_forward.10} parent=11 // pred_region
        _
      $region36: #{cnn_attention_forward.10} parent=11 // pred_fallthru
        _
      // Predicated region
      $region37: #{cnn_attention_forward.10} parent=11 // pred_check
        %p295 = pneg %p215
      $region38: #{cnn_attention_forward.10} parent=11 // pred_check_branch
        %297 = sbr.rel (%p295) target = $region40
      $region39: #{cnn_attention_forward.10} parent=11 // pred_region
        _
      $region40: #{cnn_attention_forward.10} parent=11 // pred_fallthru
        _
      // Predicated region
      $region41: #{cnn_attention_forward.10} parent=11 // pred_check
        %p298 = pneg %p236
      $region42: #{cnn_attention_forward.10} parent=11 // pred_check_branch
        %300 = sbr.rel (%p298) target = $region44
      $region43: #{cnn_attention_forward.10} parent=11 // pred_region
        _
      $region44: #{cnn_attention_forward.10} parent=11 // pred_fallthru
        _
    $region12: #{cnn_attention_forward.10} parent=5 // pred_fallthru
      _
    %p301 = scmp.lt.s32.totalorder %s16, 2
    // Predicated region
    $region45: #{cnn_attention_forward.10} parent=5 // pred_check
      %p302 = pneg %p301
    $region46: #{cnn_attention_forward.10} parent=5 // pred_check_branch
      %304 = sbr.rel (%p302) target = $region48
    $region47: #{cnn_attention_forward.10} parent=5 // pred_region
      // Predicated region
      $region49: #{cnn_attention_forward.10} parent=47 // pred_check
        %p305 = pneg %p36
      $region50: #{cnn_attention_forward.10} parent=47 // pred_check_branch
        %307 = sbr.rel (%p305) target = $region52
      $region51: #{cnn_attention_forward.10} parent=47 // pred_region
        %s308 = smul.u32 2, %s16
        %p309 = scmp.lt.s32.totalorder %s308, 3
        %s310 = scalar_select %p309, %s308, 3
        %s311 = smul.addr %s310, 4
        %s312 = scalar_lea.vmem %s0, %s311
        %s313 = smul.u32 2, %s16
      $region52: #{cnn_attention_forward.10} parent=47 // pred_fallthru
        _
      // Predicated region
      $region53: #{cnn_attention_forward.10} parent=47 // pred_check
        %p314 = pneg %p62
      $region54: #{cnn_attention_forward.10} parent=47 // pred_check_branch
        %316 = sbr.rel (%p314) target = $region56
      $region55: #{cnn_attention_forward.10} parent=47 // pred_region
        %s317 = smul.u32 2, %s16
        %p318 = scmp.lt.s32.totalorder %s317, 3
        %s319 = scalar_select %p318, %s317, 3
        %s320 = smul.addr %s319, 8
        %s321 = scalar_lea.vmem %s1, %s320
        %s322 = smul.u32 2, %s16
      $region56: #{cnn_attention_forward.10} parent=47 // pred_fallthru
        _
    $region48: #{cnn_attention_forward.10} parent=5 // pred_fallthru
      _
    %p323 = scmp.le.s32.totalorder 1, %s16
    %p324 = scmp.lt.s32.totalorder %s16, 3
    %p325 = pnand %p323, %p324
    %p326 = pneg %p325
    // Predicated region
    $region57: #{cnn_attention_forward.10} parent=5 // pred_check
      _
    $region58: #{cnn_attention_forward.10} parent=5 // pred_check_branch
      %328 = sbr.rel (%p325) target = $region60
    $region59: #{cnn_attention_forward.10} parent=5 // pred_region
      %s329 = ssub.s32 %s16, 1
      %s330 = smul.u32 2, %s21
      %p331 = scmp.lt.s32.totalorder %s330, 3
      %s332 = scalar_select %p331, %s330, 3
      %s333 = smul.addr %s332, 4
      %s334 = scalar_lea.vmem %s0, %s333
      %p335 = pneg %p42
      %p336 = pneg %p39
      %s337 = smul.u32 2, %s21
      %p338 = scmp.lt.s32.totalorder %s337, 3
      %s339 = scalar_select %p338, %s337, 3
      %s340 = smul.addr %s339, 8
      %s341 = scalar_lea.vmem %s1, %s340
      %p342 = pneg %p68
      %p343 = pneg %p65
      %p344 = pneg %p89
      %p345 = pneg %p86
      %p346 = pneg %p110
      %p347 = pneg %p107
      %p348 = pneg %p131
      %p349 = pneg %p128
      %p350 = pneg %p152
      %p351 = pneg %p149
      %p352 = pneg %p173
      %p353 = pneg %p170
      %p354 = pneg %p194
      %p355 = pneg %p191
      %p356 = pneg %p215
      %p357 = pneg %p212
      %p358 = pneg %p236
      %p359 = pneg %p233
      %p360 = pneg %p262
      %p361 = pneg %p259
      %s362 = smul.u32 2, %s21
      %p363 = scmp.lt.s32.totalorder %s362, 3
      %s364 = scalar_select %p363, %s362, 3
      %s365 = smul.addr %s364, 8
      %s366 = scalar_lea.vmem %s10, %s365
      %s367 = smul.u32 2, %s21
      %p368 = scmp.lt.s32.totalorder %s367, 3
      %s369 = scalar_select %p368, %s367, 3
      %s370 = smul.addr %s369, 4
      %s371 = scalar_lea.vmem %s0, %s370
      %s372 = smul.u32 2, %s21
      %s373 = smul.u32 2, %s21
      %p374 = scmp.lt.s32.totalorder %s373, 3
      %s375 = scalar_select %p374, %s373, 3
      %s376 = smul.addr %s375, 8
      %s377 = scalar_lea.vmem %s1, %s376
      %s378 = smul.u32 2, %s21
      %s379 = smul.u32 2, %s21
      %p380 = scmp.lt.s32.totalorder %s379, 3
      %s381 = scalar_select %p380, %s379, 3
      %s382 = smul.addr %s381, 8
      %s383 = scalar_lea.vmem %s10, %s382
      %s384 = smul.u32 2, %s21
      %v386 = vld [vmem:[%s371] sm:$0xf]
      %v387 = vld [vmem:[%s371 + $0x4] sm:$0xf]
      %v388 = vld [vmem:[%s2] sm:$0xf]
      %v389 = vld [vmem:[%s2 + $0x4] sm:$0xf]
      %v390 = vld [vmem:[%s2 + $0x8] sm:$0xf]
      %v391 = vld [vmem:[%s2 + $0xc] sm:$0xf]
      %v392 = vld [vmem:[%s3] sm:$0x1]
      %v394 = vperm.slane %v392, 0
      %v398 = vunpack.c.l.b16 %v386
      %v399 = vunpack.c.l.b16 %v387
      %v400 = vpack.c.b16 %v399, %v398
      %v405 = vunpack.c.l.b16 %v388
      %v406 = vunpack.c.l.b16 %v389
      %v407 = vunpack.c.l.b16 %v390
      %v408 = vunpack.c.l.b16 %v391
      %v409 = vpack.c.b16 %v406, %v405
      %v410 = vpack.c.b16 %v408, %v407
      %vm413 = vcmask 261120
      %v415 = vsel %vm413, %v400, 0
      %417 = vmatpush.bf16.msra.mxu0 0
      %418 = vmatpush.bf16.msra.mxu0 0
      %419 = vmatpush.bf16.msra.mxu0 0
      %420 = vmatpush.bf16.msra.mxu0 0
      %421 = vmatpush.bf16.msra.mxu0 0
      %422 = vmatpush.bf16.msra.mxu0 0
      %423 = vmatpush.bf16.msra.mxu0 %v410
      %424 = vmatpush.bf16.msra.mxu0 %v409
      %425 = vmatmul.bf16.gmra.mxu0 %v415
      %v426 = vpop.f32.mrf.mxu0
      %v427 = vadd.f32 %v394, %v426
      %v428 = vpop.f32.mrf.mxu0
      %v429 = vadd.f32 %v394, %v428
      %430 = vdwg.mxu0
      %v431 = vld [vmem:[%s377] sm:$0xff]
      %v432 = vld [vmem:[%s377 + $0x8] sm:$0xff]
      %v433 = vadd.f32 %v427, %v431
      %v434 = vadd.f32 %v429, %v432
      %v435 = vsel %vm413, %v433, 0.0
      %436 = vadd.xlane.f32.xlu0 %v435
      %v437 = vpop.xlane.xlu0 %436
      %v438 = vsel %vm413, %v434, 0.0
      %439 = vadd.xlane.f32.xlu0 %v438
      %v440 = vpop.xlane.xlu0 %439
      %v441 = vrcp.pop 32.0
      %v442 = vmul.f32 32.0, %v441
      %v443 = vsub.f32 1.0, %v442
      %v444 = vmul.f32 %v441, %v443
      %v445 = vadd.f32 %v441, %v444
      %vm446 = vweird.f32 %v441
      %v447 = vsel %vm446, %v441, %v445
      %v448 = vmul.f32 %v437, %v447
      %v449 = vmul.f32 %v440, %v447
      %v450 = vsub.f32 %v433, %v448
      %v451 = vsub.f32 %v434, %v449
      %v452 = vmul.f32 %v450, %v450
      %v453 = vmul.f32 %v451, %v451
      %v454 = vsel %vm413, %v452, 0.0
      %455 = vadd.xlane.f32.xlu0 %v454
      %v456 = vpop.xlane.xlu0 %455
      %v457 = vsel %vm413, %v453, 0.0
      %458 = vadd.xlane.f32.xlu0 %v457
      %v459 = vpop.xlane.xlu0 %458
      %v460 = vmul.f32 %v456, %v447
      %v461 = vmul.f32 %v459, %v447
      %v462 = vadd.f32 %v460, 1e-05
      %v463 = vadd.f32 %v461, 1e-05
      %v464 = vrsqrt.pop %v462
      %v465 = vmul.f32 %v464, %v462
      %v466 = vmul.f32 %v465, %v464
      %v467 = vmul.f32 0.5, %v466
      %v468 = vsub.f32 1.5, %v467
      %v469 = vmul.f32 %v464, %v468
      %vm470 = vweird.f32 %v462
      %vm471 = vweird.f32 %v464
      %vm472 = vmor %vm470, %vm471
      %v473 = vsel %vm472, %v464, %v469
      %v474 = vrsqrt.pop %v463
      %v475 = vmul.f32 %v474, %v463
      %v476 = vmul.f32 %v475, %v474
      %v477 = vmul.f32 0.5, %v476
      %v478 = vsub.f32 1.5, %v477
      %v479 = vmul.f32 %v474, %v478
      %vm480 = vweird.f32 %v463
      %vm481 = vweird.f32 %v474
      %vm482 = vmor %vm480, %vm481
      %v483 = vsel %vm482, %v474, %v479
      %v484 = vmul.f32 %v450, %v473
      %v485 = vmul.f32 %v451, %v483
      %v486 = vld [vmem:[%s4] sm:$0x1]
      %v488 = vperm.slane %v486, 0
      %v490 = vmul.f32 %v484, %v488
      %v491 = vmul.f32 %v485, %v488
      %v492 = vld [vmem:[%s5] sm:$0x1]
      %v494 = vperm.slane %v492, 0
      %v496 = vadd.f32 %v490, %v494
      %v497 = vadd.f32 %v491, %v494
      %v498 = vpack.c.bf16 %v497, %v496
      %v499 = vld [vmem:[%s6] sm:$0xf]
      %v500 = vld [vmem:[%s6 + $0x4] sm:$0xf]
      %v501 = vld [vmem:[%s6 + $0x8] sm:$0xf]
      %v502 = vld [vmem:[%s6 + $0xc] sm:$0xf]
      %v503 = vld [vmem:[%s7] sm:$0x1]
      %v505 = vperm.slane %v503, 0
      %v511 = vunpack.c.l.b16 %v499
      %v512 = vunpack.c.l.b16 %v500
      %v513 = vunpack.c.l.b16 %v501
      %v514 = vunpack.c.l.b16 %v502
      %v515 = vpack.c.b16 %v512, %v511
      %v516 = vpack.c.b16 %v514, %v513
      %v520 = vsel %vm413, %v498, 0
      %522 = vmatpush.bf16.msra.mxu0 0
      %523 = vmatpush.bf16.msra.mxu0 0
      %524 = vmatpush.bf16.msra.mxu0 0
      %525 = vmatpush.bf16.msra.mxu0 0
      %526 = vmatpush.bf16.msra.mxu0 0
      %527 = vmatpush.bf16.msra.mxu0 0
      %528 = vmatpush.bf16.msra.mxu0 %v516
      %529 = vmatpush.bf16.msra.mxu0 %v515
      %530 = vmatmul.bf16.gmra.mxu0 %v520
      %v531 = vpop.f32.mrf.mxu0
      %v532 = vadd.f32 %v505, %v531
      %v533 = vpop.f32.mrf.mxu0
      %v534 = vadd.f32 %v505, %v533
      %535 = vdwg.mxu0
      %v536 = vmax.f32 %v532, 0.0
      %v537 = vmax.f32 %v534, 0.0
      %v538 = vpack.c.bf16 %v537, %v536
      %v539 = vld [vmem:[%s8] sm:$0xf]
      %v540 = vld [vmem:[%s8 + $0x4] sm:$0xf]
      %v541 = vld [vmem:[%s8 + $0x8] sm:$0xf]
      %v542 = vld [vmem:[%s8 + $0xc] sm:$0xf]
      %v543 = vld [vmem:[%s8 + $0x10] sm:$0xf]
      %v544 = vld [vmem:[%s8 + $0x14] sm:$0xf]
      %v545 = vld [vmem:[%s8 + $0x18] sm:$0xf]
      %v546 = vld [vmem:[%s8 + $0x1c] sm:$0xf]
      %v547 = vld [vmem:[%s8 + $0x20] sm:$0xf]
      %v548 = vld [vmem:[%s8 + $0x24] sm:$0xf]
      %v549 = vld [vmem:[%s8 + $0x28] sm:$0xf]
      %v550 = vld [vmem:[%s8 + $0x2c] sm:$0xf]
      %v551 = vld [vmem:[%s8 + $0x30] sm:$0xf]
      %v552 = vld [vmem:[%s8 + $0x34] sm:$0xf]
      %v553 = vld [vmem:[%s8 + $0x38] sm:$0xf]
      %v554 = vld [vmem:[%s8 + $0x3c] sm:$0xf]
      %v555 = vld [vmem:[%s9] sm:$0x1]
      %v557 = vperm.slane %v555, 0
      %v575 = vunpack.c.l.b16 %v539
      %v576 = vunpack.c.l.b16 %v540
      %v577 = vunpack.c.l.b16 %v541
      %v578 = vunpack.c.l.b16 %v542
      %v579 = vunpack.c.l.b16 %v543
      %v580 = vunpack.c.l.b16 %v544
      %v581 = vunpack.c.l.b16 %v545
      %v582 = vunpack.c.l.b16 %v546
      %v583 = vunpack.c.l.b16 %v547
      %v584 = vunpack.c.l.b16 %v548
      %v585 = vunpack.c.l.b16 %v549
      %v586 = vunpack.c.l.b16 %v550
      %v587 = vunpack.c.l.b16 %v551
      %v588 = vunpack.c.l.b16 %v552
      %v589 = vunpack.c.l.b16 %v553
      %v590 = vunpack.c.l.b16 %v554
      %v591 = vpack.c.b16 %v576, %v575
      %v592 = vpack.c.b16 %v578, %v577
      %v593 = vpack.c.b16 %v580, %v579
      %v594 = vpack.c.b16 %v582, %v581
      %v595 = vpack.c.b16 %v584, %v583
      %v596 = vpack.c.b16 %v586, %v585
      %v597 = vpack.c.b16 %v588, %v587
      %v598 = vpack.c.b16 %v590, %v589
      %607 = vmatpush.bf16.msra.mxu0 %v598
      %608 = vmatpush.bf16.msra.mxu0 %v597
      %609 = vmatpush.bf16.msra.mxu0 %v596
      %610 = vmatpush.bf16.msra.mxu0 %v595
      %611 = vmatpush.bf16.msra.mxu0 %v594
      %612 = vmatpush.bf16.msra.mxu0 %v593
      %613 = vmatpush.bf16.msra.mxu0 %v592
      %614 = vmatpush.bf16.msra.mxu0 %v591
      %615 = vmatmul.bf16.gmra.mxu0 %v538
      %v616 = vpop.f32.mrf.mxu0
      %v617 = vadd.f32 %v557, %v616
      %v618 = vpop.f32.mrf.mxu0
      %v619 = vadd.f32 %v557, %v618
      %620 = vdwg.mxu0
      %v621 = vadd.f32 %v433, %v617
      %v622 = vadd.f32 %v434, %v619
      %623 = vst.msk [vmem:[%s383] sm:$0xff] %vm413, %v621
      %624 = vst.msk [vmem:[%s383 + $0x8] sm:$0xff] %vm413, %v622
      %s625 = smul.u32 2, %s21
      %p626 = scmp.lt.s32.totalorder %s625, 3
      %s627 = scalar_select %p626, %s625, 3
      %s628 = smul.addr %s627, 8
      %s629 = scalar_lea.vmem %s10, %s628
      // Predicated region
      $region61: #{cnn_attention_forward.10} parent=59 // pred_check
        %p630 = pneg %p259
      $region62: #{cnn_attention_forward.10} parent=59 // pred_check_branch
        %632 = sbr.rel (%p630) target = $region64
      $region63: #{cnn_attention_forward.10} parent=59 // pred_region
        %s633 = smul.u32 2, %s21
      $region64: #{cnn_attention_forward.10} parent=59 // pred_fallthru
        _
    $region60: #{cnn_attention_forward.10} parent=5 // pred_fallthru
      _
    %p634 = scmp.le.s32.totalorder 2, %s16
    // Predicated region
    $region65: #{cnn_attention_forward.10} parent=5 // pred_check
      %p635 = pneg %p634
    $region66: #{cnn_attention_forward.10} parent=5 // pred_check_branch
      %637 = sbr.rel (%p635) target = $region68
    $region67: #{cnn_attention_forward.10} parent=5 // pred_region
      %s638 = ssub.s32 %s16, 2
      // Predicated region
      $region69: #{cnn_attention_forward.10} parent=67 // pred_check
        %p639 = pneg %p265
      $region70: #{cnn_attention_forward.10} parent=67 // pred_check_branch
        %641 = sbr.rel (%p639) target = $region72
      $region71: #{cnn_attention_forward.10} parent=67 // pred_region
        %s642 = smul.u32 2, %s22
        %p643 = scmp.lt.s32.totalorder %s642, 3
        %s644 = scalar_select %p643, %s642, 3
        %s645 = smul.addr %s644, 8
        %s646 = scalar_lea.vmem %s10, %s645
      $region72: #{cnn_attention_forward.10} parent=67 // pred_fallthru
        _
    $region68: #{cnn_attention_forward.10} parent=5 // pred_fallthru
      _
  $region6: #{cnn_attention_forward.10} parent=0 // loop_footer
    %s20 = sadd.s32 1, %s16
  $region7: #{cnn_attention_forward.10} parent=0 // loop_footer_branch
    %15 = sbr.rel target = $region3
  $region8: #{cnn_attention_forward.10} parent=0 // loop_exit
    _

// kernel: cnn_attention_forward.13
$region0: #{cnn_attention_forward.13}
  #allocation0 [shape = 'u32[]', space=smem, size = 0x4, offset = 0x4, fixed_abs, tag = 'smem constant byte address 0x4 - core index']
  #allocation1 [shape = 'u32[72,128]{1,0:T(1,128)}', space=vmem, size = 0x9000, scoped, tag = 'internal scratch']
  %s0 = inlined_call_operand.vmem [shape: f32[32,32], index: 0, kind: input, shape index: {}]
  %s1 = inlined_call_operand.vmem [shape: bf16[32,128], index: 1, kind: input, shape index: {}]
  %s2 = inlined_call_operand.vmem [shape: f32[1,128], index: 2, kind: input, shape index: {}]
  %s3 = inlined_call_operand.vmem [shape: bf16[5,128], index: 3, kind: input, shape index: {}]
  %s4 = inlined_call_operand.vmem [shape: f32[5,1], index: 4, kind: input, shape index: {}]
  %s5 = inlined_call_operand.vmem [shape: f32[5,32], index: 5, kind: output, shape index: {}]
  %s6 = sld [smem:[#allocation0]]
  $region30: #{cnn_attention_forward.13} parent=0
    _
  %s8 = ssub.s32 1, %s6
  %s9 = scalar_select 0, %s8, %s6
  // Predicated region
  $region2: #{cnn_attention_forward.13} parent=0 // pred_check
    _
  $region3: #{cnn_attention_forward.13} parent=0 // pred_check_branch
    %11 = sbr.rel (0) target = $region5
  $region4: #{cnn_attention_forward.13} parent=0 // pred_region
    _
  $region5: #{cnn_attention_forward.13} parent=0 // pred_fallthru
    _
  // Predicated region
  $region6: #{cnn_attention_forward.13} parent=0 // pred_check
    _
  $region7: #{cnn_attention_forward.13} parent=0 // pred_check_branch
    %13 = sbr.rel (0) target = $region9
  $region8: #{cnn_attention_forward.13} parent=0 // pred_region
    _
  $region9: #{cnn_attention_forward.13} parent=0 // pred_fallthru
    _
  // Predicated region
  $region10: #{cnn_attention_forward.13} parent=0 // pred_check
    _
  $region11: #{cnn_attention_forward.13} parent=0 // pred_check_branch
    %15 = sbr.rel (0) target = $region13
  $region12: #{cnn_attention_forward.13} parent=0 // pred_region
    _
  $region13: #{cnn_attention_forward.13} parent=0 // pred_fallthru
    _
  // Predicated region
  $region14: #{cnn_attention_forward.13} parent=0 // pred_check
    _
  $region15: #{cnn_attention_forward.13} parent=0 // pred_check_branch
    %17 = sbr.rel (0) target = $region17
  $region16: #{cnn_attention_forward.13} parent=0 // pred_region
    _
  $region17: #{cnn_attention_forward.13} parent=0 // pred_fallthru
    _
  // Predicated region
  $region18: #{cnn_attention_forward.13} parent=0 // pred_check
    _
  $region19: #{cnn_attention_forward.13} parent=0 // pred_check_branch
    %19 = sbr.rel (0) target = $region21
  $region20: #{cnn_attention_forward.13} parent=0 // pred_region
    _
  $region21: #{cnn_attention_forward.13} parent=0 // pred_fallthru
    _
  %v21 = vld [vmem:[%s0] sm:$0xff]
  %v22 = vld [vmem:[%s0 + $0x8] sm:$0xff]
  %v23 = vld [vmem:[%s0 + $0x10] sm:$0xff]
  %v24 = vld [vmem:[%s0 + $0x18] sm:$0xff]
  %v25 = vpack.c.bf16 %v22, %v21
  %v26 = vpack.c.bf16 %v24, %v23
  %v27 = vld [vmem:[%s1] sm:$0xf]
  %v28 = vld [vmem:[%s1 + $0x4] sm:$0xf]
  %v29 = vld [vmem:[%s1 + $0x8] sm:$0xf]
  %v30 = vld [vmem:[%s1 + $0xc] sm:$0xf]
  %v31 = vld [vmem:[%s2] sm:$0x1]
  %v33 = vperm.slane %v31, 0
  %v39 = vunpack.c.l.b16 %v27
  %v40 = vunpack.c.l.b16 %v28
  %v41 = vunpack.c.l.b16 %v29
  %v42 = vunpack.c.l.b16 %v30
  %v43 = vpack.c.b16 %v40, %v39
  %v44 = vpack.c.b16 %v42, %v41
  %vm47 = vcmask 261120
  %v49 = vsel %vm47, %v25, 0
  %v52 = vsel %vm47, %v26, 0
  %54 = vmatpush.bf16.msra.mxu0 0
  %55 = vmatpush.bf16.msra.mxu0 0
  %56 = vmatpush.bf16.msra.mxu0 0
  %57 = vmatpush.bf16.msra.mxu0 0
  %58 = vmatpush.bf16.msra.mxu0 0
  %59 = vmatpush.bf16.msra.mxu0 0
  %60 = vmatpush.bf16.msra.mxu0 %v44
  %61 = vmatpush.bf16.msra.mxu0 %v43
  %62 = vmatmul.bf16.gmra.mxu0 %v49
  %v63 = vpop.f32.mrf.mxu0
  %v64 = vadd.f32 %v33, %v63
  %v65 = vpop.f32.mrf.mxu0
  %v66 = vadd.f32 %v33, %v65
  %67 = vmatmul.bf16.gmra.mxu0 %v52
  %v68 = vpop.f32.mrf.mxu0
  %v69 = vadd.f32 %v33, %v68
  %v70 = vpop.f32.mrf.mxu0
  %v71 = vadd.f32 %v33, %v70
  %72 = vdwg.mxu0
  %v73 = vmax.f32 %v64, 0.0
  %v74 = vmax.f32 %v66, 0.0
  %v75 = vmax.f32 %v69, 0.0
  %v76 = vmax.f32 %v71, 0.0
  %v77 = vld [vmem:[%s3] sm:$0x7]
  %v78 = vpack.c.bf16 %v74, %v73
  %v79 = vpack.c.bf16 %v76, %v75
  %v80 = vld [vmem:[%s4] sm:$0x1f]
  %82 = vset.pattern.permute.xlu0 0
  %83 = vperm.xlu0 %82, %v80
  %v84 = vpop.permute.xlu0 %83
  %86 = vmatpush.bf16.xpose.msra.mxu0 0
  %87 = vmatpush.bf16.xpose.msra.mxu0 0
  %88 = vmatpush.bf16.xpose.msra.mxu0 0
  %89 = vmatpush.bf16.xpose.msra.mxu0 0
  %90 = vmatpush.bf16.xpose.msra.mxu0 0
  %91 = vmatpush.bf16.xpose.msra.mxu0 0
  %92 = vmatpush.bf16.xpose.msra.mxu0 %v79
  %93 = vmatpush.bf16.xpose.msra.mxu0 %v78
  %94 = vmatmul.bf16.gmra.mxu0 %v77
  %v95 = vpop.f32.mrf.mxu0
  %v96 = vadd.f32 %v84, %v95
  %v97 = vpop.f32.mrf.mxu0
  %98 = vdwg.mxu0
  %vm99 = vcmask 258048
  %100 = vst.msk [vmem:[%s5] sm:$0x1f] %vm99, %v96
  // Predicated region
  $region22: #{cnn_attention_forward.13} parent=0 // pred_check
    _
  $region23: #{cnn_attention_forward.13} parent=0 // pred_check_branch
    %102 = sbr.rel (0) target = $region25
  $region24: #{cnn_attention_forward.13} parent=0 // pred_region
    _
  $region25: #{cnn_attention_forward.13} parent=0 // pred_fallthru
    _
  // Predicated region
  $region26: #{cnn_attention_forward.13} parent=0 // pred_check
    _
  $region27: #{cnn_attention_forward.13} parent=0 // pred_check_branch
    %104 = sbr.rel (0) target = $region29
  $region28: #{cnn_attention_forward.13} parent=0 // pred_region
    _
  $region29: #{cnn_attention_forward.13} parent=0 // pred_fallthru
    _

</llo_original>
